<compile_context>
chip_gen: v6e
topology: v6e:2x2x1
jax: 0.10.0
libtpu: 0.0.40
codegen_flags: <defaults>
</compile_context>

<pallas_src>
import functools
import math

import jax
import jax.numpy as jnp
import numpy as np
from jax.experimental import pallas as pl
from jax.experimental.pallas import tpu as pltpu


# ----------------------------- Pallas kernel --------------------------------
def encoder_stack_kernel(lens_ref,                       # SMEM, (B,) int32 (prefetched)
                         x_ref,                          # (Bblk, S, D) fp32 embedded input
                         ln_g_ref, ln_b_ref,             # (1, 1, D) fp32
                         wqkv_ref, bqkv_ref,             # (1, D, 3D) bf16 / (1, 1, 3D) fp32
                         wo_ref, bo_ref,                 # (1, D, D) bf16 / (1, 1, D) fp32
                         w1_ref, b1_ref, w2_ref, b2_ref, # FFN
                         out_ref,                        # (Bblk, S, D) fp32, revisited over L
                         bias_ref,                       # VMEM scratch (Bblk, S) fp32
                         *, num_heads):
    bb = pl.program_id(0)        # batch-block index
    layer = pl.program_id(1)

    Bblk, S, D = out_ref.shape
    H = num_heads
    dh = D // H
    M = Bblk * S

    # First layer: load the embedded input into the resident residual stream and
    # build the key-padding bias once (reused by every layer of this batch block).
    @pl.when(layer == 0)
    def _():
        out_ref[...] = x_ref[...]
        kpos = jax.lax.broadcasted_iota(jnp.int32, (1, S), 1)
        for b in range(Bblk):                            # static unroll, tiny
            blen = lens_ref[bb * Bblk + b]
            bias_ref[pl.ds(b, 1), :] = jnp.where(
                kpos >= blen, jnp.float32(-1e30), jnp.float32(0.0))

    x = out_ref[...]                                     # (Bblk, S, D) fp32 residual stream

    # --- pre-LayerNorm (eps = 1e-5) ---
    mean = jnp.mean(x, axis=-1, keepdims=True)
    var = jnp.mean(jnp.square(x - mean), axis=-1, keepdims=True)
    xn = (x - mean) * jax.lax.rsqrt(var + 1e-5) * ln_g_ref[0] + ln_b_ref[0]

    xn_flat = xn.reshape(M, D)                           # fold batch into M (MXU rows)
    xn_b = xn_flat.astype(jnp.bfloat16)

    # --- fused QKV projection: one lane-dense N=3D matmul (scale folded in wrapper) ---
    qkv = jnp.dot(xn_b, wqkv_ref[0],
                  preferred_element_type=jnp.float32) + bqkv_ref[0]   # (M, 3D) fp32

    q = qkv[:, :D].astype(jnp.bfloat16)                  # cast once, keep bf16
    k = qkv[:, D:2 * D].astype(jnp.bfloat16)
    v = qkv[:, 2 * D:].astype(jnp.bfloat16)

    # Head-major stacks (H, M, dh) for the single-batch-dim attention einsums.
    qh = jnp.stack([q[:, h * dh:(h + 1) * dh] for h in range(H)], axis=0)
    kh = jnp.stack([k[:, h * dh:(h + 1) * dh] for h in range(H)], axis=0)
    vh = jnp.stack([v[:, h * dh:(h + 1) * dh] for h in range(H)], axis=0)

    bias = bias_ref[...]                                 # (Bblk, S)

    ctx_rows = []
    for b in range(Bblk):                                # static unroll over batch rows
        rows = slice(b * S, (b + 1) * S)
        qb, kb, vb = qh[:, rows, :], kh[:, rows, :], vh[:, rows, :]   # (H, S, dh)

        s = jnp.einsum('hqd,hkd->hqk', qb, kb,
                       preferred_element_type=jnp.float32)            # (H, S, S)
        s = s + bias[b:b + 1, :][None]                   # (1,1,S) key-padding bias

        m = jnp.max(s, axis=-1, keepdims=True)
        p = jnp.exp(s - m)
        denom = jnp.sum(p, axis=-1, keepdims=True)
        p = p * pl.reciprocal(denom, approx=True)        # EUP reciprocal

        ctx_b = jnp.einsum('hqk,hkd->hqd', p.astype(jnp.bfloat16), vb,
                           preferred_element_type=jnp.float32)        # (H, S, dh)
        # lane-concat heads back into the original column layout -> (S, D)
        ctx_rows.append(jnp.concatenate([ctx_b[h] for h in range(H)], axis=-1))

    ctx = jnp.concatenate(ctx_rows, axis=0).astype(jnp.bfloat16)      # (M, D) bf16

    # --- output projection: single K=D contraction ---
    attn = jnp.dot(ctx, wo_ref[0],
                   preferred_element_type=jnp.float32) + bo_ref[0]    # (M, D)

    y = attn + xn_flat                                   # residual adds LN output (per repo)

    # --- feed forward: Linear -> ReLU -> Linear (dropout = identity in eval) ---
    y_b = y.astype(jnp.bfloat16)
    h1 = jnp.maximum(
        jnp.dot(y_b, w1_ref[0], preferred_element_type=jnp.float32) + b1_ref[0], 0.0)
    ff = jnp.dot(h1.astype(jnp.bfloat16), w2_ref[0],
                 preferred_element_type=jnp.float32) + b2_ref[0]

    out_ref[...] = (ff + y).reshape(Bblk, S, D).astype(out_ref.dtype)


def encoder_stack_pallas(x, inputs_lens, kp, num_heads, batch_blocks=1):
    B, S, D = x.shape
    L = kp["wqkv"].shape[0]
    F = kp["w1"].shape[2]
    assert B % batch_blocks == 0
    Bblk = B // batch_blocks

    def xmap(bb, l, lens):
        return (bb, 0, 0)

    def lmap(bb, l, lens):
        return (l, 0, 0)

    in_specs = [
        pl.BlockSpec((Bblk, S, D), xmap),                # x (embedded input)
        pl.BlockSpec((1, 1, D), lmap),                   # ln gamma
        pl.BlockSpec((1, 1, D), lmap),                   # ln beta
        pl.BlockSpec((1, D, 3 * D), lmap),               # fused Wqkv (scale folded)
        pl.BlockSpec((1, 1, 3 * D), lmap),               # fused bqkv (scale folded)
        pl.BlockSpec((1, D, D), lmap),                   # Wo
        pl.BlockSpec((1, 1, D), lmap),                   # bo
        pl.BlockSpec((1, D, F), lmap),                   # W1
        pl.BlockSpec((1, 1, F), lmap),                   # b1
        pl.BlockSpec((1, F, D), lmap),                   # W2
        pl.BlockSpec((1, 1, D), lmap),                   # b2
    ]
    out_spec = pl.BlockSpec((Bblk, S, D), xmap)          # revisited across the layer axis

    return pl.pallas_call(
        functools.partial(encoder_stack_kernel, num_heads=num_heads),
        out_shape=jax.ShapeDtypeStruct((B, S, D), jnp.float32),
        grid_spec=pltpu.PrefetchScalarGridSpec(
            num_scalar_prefetch=1,                       # inputs_lens -> SMEM
            grid=(batch_blocks, L),                      # batch merged into the block;
            in_specs=in_specs,                           # use batch_blocks=2 on v7x (2 TCs)
            out_specs=out_spec,
            scratch_shapes=[pltpu.VMEM((Bblk, S), jnp.float32)]),   # key-pad bias, reused per layer
        compiler_params=pltpu.CompilerParams(
            dimension_semantics=("parallel", "arbitrary"),
            vmem_limit_bytes=32 * 1024 * 1024),
    )(inputs_lens, x,
      kp["ln_g"], kp["ln_b"], kp["wqkv"], kp["bqkv"],
      kp["wo"], kp["bo"], kp["w1"], kp["b1"], kp["w2"], kp["b2"])


# ------------------------- parameter prep (plain JAX) ------------------------
def prepare_kernel_params(params, num_heads):
    """Stack per-layer weights, fuse Q|K|V, fold 1/sqrt(dh), cast weights to bf16."""
    layers = params["layers"]
    L = len(layers)
    D = layers[0]["wq"].shape[0]
    dh = D // num_heads
    inv_sqrt_dh = 1.0 / float(np.sqrt(dh))

    def stack(name):
        return jnp.stack([layer[name] for layer in layers], axis=0)

    wqkv = jnp.concatenate(
        [stack("wq") * inv_sqrt_dh, stack("wk"), stack("wv")], axis=-1)   # (L, D, 3D)
    bqkv = jnp.concatenate(
        [stack("bq") * inv_sqrt_dh, stack("bk"), stack("bv")], axis=-1)   # (L, 1, 3D)

    return dict(
        ln_g=stack("ln_g"),                              # (L, 1, D) fp32
        ln_b=stack("ln_b"),
        wqkv=wqkv.astype(jnp.bfloat16),                  # (L, D, 3D) bf16
        bqkv=bqkv,                                       # (L, 1, 3D) fp32
        wo=stack("wo").astype(jnp.bfloat16),             # (L, D, D) bf16
        bo=stack("bo"),                                  # (L, 1, D)
        w1=stack("w1").astype(jnp.bfloat16),             # (L, D, F)
        b1=stack("b1"),                                  # (L, 1, F)
        w2=stack("w2").astype(jnp.bfloat16),             # (L, F, D)
        b2=stack("b2"),                                  # (L, 1, D)
    )


# ------------------------------- glue (JAX) ---------------------------------
def sinusoidal_pe(length, dim):
    pos = np.arange(length, dtype=np.float32)[:, None]
    div = np.exp(np.arange(0, dim, 2, dtype=np.float32) * (-math.log(10000.0) / dim))
    pe = np.zeros((length, dim), dtype=np.float32)
    pe[:, 0::2] = np.sin(pos * div)
    pe[:, 1::2] = np.cos(pos * div)
    return jnp.asarray(pe)


def label_encoder_forward(inputs, inputs_lens, params, num_heads, batch_blocks=1):
    # TODO(synk): eos-id filtering needs a data-dependent shape; assumed identity here.
    B, T = inputs.shape
    D = params["embedding"].shape[1]
    scale = float(np.sqrt(D))

    x = params["embedding"][inputs] * scale + sinusoidal_pe(T, D)[None]   # (B, T, D) fp32
    kp = prepare_kernel_params(params, num_heads)
    return encoder_stack_pallas(x.astype(jnp.float32),
                                inputs_lens.astype(jnp.int32), kp, num_heads,
                                batch_blocks=batch_blocks)


# ------------------ pure-JAX reference (mirrors kernel math) ------------------
def label_encoder_ref(inputs, inputs_lens, params, num_heads):
    B, T = inputs.shape
    D = params["embedding"].shape[1]
    H = num_heads
    dh = D // H
    x = params["embedding"][inputs] * float(np.sqrt(D)) + sinusoidal_pe(T, D)[None]
    kp = prepare_kernel_params(params, num_heads)
    L = kp["wqkv"].shape[0]

    key_pad = jnp.arange(T)[None, :] >= inputs_lens[:, None]          # (B, T)
    bias = jnp.where(key_pad, -1e30, 0.0).astype(jnp.float32)

    for l in range(L):
        mean = jnp.mean(x, axis=-1, keepdims=True)
        var = jnp.mean(jnp.square(x - mean), axis=-1, keepdims=True)
        xn = (x - mean) * jax.lax.rsqrt(var + 1e-5) * kp["ln_g"][l] + kp["ln_b"][l]

        qkv = jnp.einsum('bsd,de->bse', xn.astype(jnp.bfloat16), kp["wqkv"][l],
                         preferred_element_type=jnp.float32) + kp["bqkv"][l]
        q = qkv[..., :D].astype(jnp.bfloat16).reshape(B, T, H, dh)
        k = qkv[..., D:2 * D].astype(jnp.bfloat16).reshape(B, T, H, dh)
        v = qkv[..., 2 * D:].astype(jnp.bfloat16).reshape(B, T, H, dh)

        s = jnp.einsum('bqhc,bkhc->bhqk', q, k,
                       preferred_element_type=jnp.float32) + bias[:, None, None, :]
        p = jax.nn.softmax(s, axis=-1)
        ctx = jnp.einsum('bhqk,bkhc->bqhc', p.astype(jnp.bfloat16), v,
                         preferred_element_type=jnp.float32).reshape(B, T, D)

        attn = jnp.einsum('bsd,de->bse', ctx.astype(jnp.bfloat16), kp["wo"][l],
                          preferred_element_type=jnp.float32) + kp["bo"][l]
        y = attn + xn
        h1 = jnp.maximum(
            jnp.einsum('bsd,df->bsf', y.astype(jnp.bfloat16), kp["w1"][l],
                       preferred_element_type=jnp.float32) + kp["b1"][l], 0.0)
        ff = jnp.einsum('bsf,fd->bsd', h1.astype(jnp.bfloat16), kp["w2"][l],
                        preferred_element_type=jnp.float32) + kp["b2"][l]
        x = ff + y
    return x


# --------------------------- deterministic init ------------------------------
def init_params(key, num_vocabs, model_dim, ff_dim, num_layers):
    keys = jax.random.split(key, 1 + num_layers)
    params = {"embedding": 0.1 * jax.random.normal(
        keys[0], (num_vocabs, model_dim), jnp.float32), "layers": []}
    for li in range(num_layers):
        ks = jax.random.split(keys[1 + li], 8)
        s = 0.05
        layer = {
            "ln_g": jnp.ones((1, model_dim), jnp.float32),
            "ln_b": jnp.zeros((1, model_dim), jnp.float32),
            "wq": s * jax.random.normal(ks[0], (model_dim, model_dim), jnp.float32),
            "bq": jnp.zeros((1, model_dim), jnp.float32),
            "wk": s * jax.random.normal(ks[1], (model_dim, model_dim), jnp.float32),
            "bk": jnp.zeros((1, model_dim), jnp.float32),
            "wv": s * jax.random.normal(ks[2], (model_dim, model_dim), jnp.float32),
            "bv": jnp.zeros((1, model_dim), jnp.float32),
            "wo": s * jax.random.normal(ks[3], (model_dim, model_dim), jnp.float32),
            "bo": jnp.zeros((1, model_dim), jnp.float32),
            "w1": s * jax.random.normal(ks[4], (model_dim, ff_dim), jnp.float32),
            "b1": 0.01 * jax.random.normal(ks[5], (1, ff_dim), jnp.float32),
            "w2": s * jax.random.normal(ks[6], (ff_dim, model_dim), jnp.float32),
            "b2": 0.01 * jax.random.normal(ks[7], (1, model_dim), jnp.float32),
        }
        params["layers"].append(layer)
    return params


# ---------------------------------- main -------------------------------------
if __name__ == "__main__":
    B, T = 2, 8
    # model_dim chosen lane-dense (multiple of 128).
    NUM_VOCABS, MODEL_DIM, FF_DIM, NUM_LAYERS, NUM_HEADS = 16, 128, 256, 2, 4

    key = jax.random.PRNGKey(0)
    k_param, k_tok = jax.random.split(key)
    params = init_params(k_param, NUM_VOCABS, MODEL_DIM, FF_DIM, NUM_LAYERS)

    # tokens in [3, NUM_VOCABS): no eos_id (=2) so the eos-filter is identity
    inputs = jax.random.randint(k_tok, (B, T), 3, NUM_VOCABS, dtype=jnp.int32)
    inputs_lens = jnp.array([T, 5], dtype=jnp.int32)

    # batch_blocks=1: whole batch in one block (v5e/v6e); use 2 on v7x for both TCs.
    out = label_encoder_forward(inputs, inputs_lens, params, NUM_HEADS, batch_blocks=1)
    out = jax.block_until_ready(out)

    ref = label_encoder_ref(inputs, inputs_lens, params, NUM_HEADS)
    # tolerance covers bf16 matmuls + approximate (EUP) reciprocal in the kernel softmax
    np.testing.assert_allclose(np.asarray(out), np.asarray(ref), rtol=2e-2, atol=2e-2)
    assert out.shape == (B, T, MODEL_DIM)
    print("KERNEL_OK")
</pallas_src>

<mosaic_0001>
module attributes {stable_mosaic.version = 11 : i64} {
  func.func @encoder_stack_kernel(%arg0: i32, %arg1: i32, %arg2: memref<2xi32, #tpu.memory_space<smem>>, %arg3: memref<2x8x128xf32, #tpu.memory_space<vmem>>, %arg4: memref<1x1x128xf32, #tpu.memory_space<vmem>>, %arg5: memref<1x1x128xf32, #tpu.memory_space<vmem>>, %arg6: memref<1x128x384xbf16, #tpu.memory_space<vmem>>, %arg7: memref<1x1x384xf32, #tpu.memory_space<vmem>>, %arg8: memref<1x128x128xbf16, #tpu.memory_space<vmem>>, %arg9: memref<1x1x128xf32, #tpu.memory_space<vmem>>, %arg10: memref<1x128x256xbf16, #tpu.memory_space<vmem>>, %arg11: memref<1x1x256xf32, #tpu.memory_space<vmem>>, %arg12: memref<1x256x128xbf16, #tpu.memory_space<vmem>>, %arg13: memref<1x1x128xf32, #tpu.memory_space<vmem>>, %arg14: memref<2x8x128xf32, #tpu.memory_space<vmem>>, %arg15: memref<2x8xf32, #tpu.memory_space<vmem>>) attributes {dimension_semantics = [#tpu.dimension_semantics<parallel>, #tpu.dimension_semantics<arbitrary>], iteration_bounds = array<i64: 1, 2>, scalar_prefetch = 1 : i64, scratch_operands = 1 : i64, tpu.core_type = #tpu.core_type<tc>, window_params = [{transform_indices = @transform_0, window_bounds = array<i64: 2, 8, 128>}, {transform_indices = @transform_1, window_bounds = array<i64: 1, 1, 128>}, {transform_indices = @transform_2, window_bounds = array<i64: 1, 1, 128>}, {transform_indices = @transform_3, window_bounds = array<i64: 1, 128, 384>}, {transform_indices = @transform_4, window_bounds = array<i64: 1, 1, 384>}, {transform_indices = @transform_5, window_bounds = array<i64: 1, 128, 128>}, {transform_indices = @transform_6, window_bounds = array<i64: 1, 1, 128>}, {transform_indices = @transform_7, window_bounds = array<i64: 1, 128, 256>}, {transform_indices = @transform_8, window_bounds = array<i64: 1, 1, 256>}, {transform_indices = @transform_9, window_bounds = array<i64: 1, 256, 128>}, {transform_indices = @transform_10, window_bounds = array<i64: 1, 1, 128>}, {transform_indices = @transform_11, window_bounds = array<i64: 2, 8, 128>}]} {
    %c0_i32 = arith.constant 0 : i32
    %0 = arith.cmpi eq, %arg1, %c0_i32 : i32
    %1 = arith.extui %0 : i1 to i32
    %c0_i32_0 = arith.constant 0 : i32
    %2 = arith.cmpi ne, %1, %c0_i32_0 : i32
    scf.if %2 {
      %c0_55 = arith.constant 0 : index
      %c0_56 = arith.constant 0 : index
      %c0_57 = arith.constant 0 : index
      %164 = vector.load %arg3[%c0_55, %c0_56, %c0_57] : memref<2x8x128xf32, #tpu.memory_space<vmem>>, vector<2x8x128xf32>
      %c0_58 = arith.constant 0 : index
      %c0_59 = arith.constant 0 : index
      %c0_60 = arith.constant 0 : index
      %165 = vector.load %arg14[%c0_58, %c0_59, %c0_60] : memref<2x8x128xf32, #tpu.memory_space<vmem>>, vector<2x8x128xf32>
      tpu.vector_store %arg14[%c0_58, %c0_59, %c0_60], %164 {strides = array<i32>} : memref<2x8x128xf32, #tpu.memory_space<vmem>>, vector<2x8x128xf32>,
      %166 = tpu.iota {dimensions = array<i32: 1>} : vector<1x8xi32>
      %c2_i32 = arith.constant 2 : i32
      %167 = arith.muli %arg0, %c2_i32 : i32
      %c0_i32_61 = arith.constant 0 : i32
      %168 = arith.addi %167, %c0_i32_61 : i32
      %169 = arith.index_cast %168 : i32 to index
      %170 = memref.load %arg2[%169] : memref<2xi32, #tpu.memory_space<smem>>
      %171 = vector.broadcast %170 : i32 to vector<1x8xi32>
      %172 = arith.cmpi sge, %166, %171 : vector<1x8xi32>
      %cst_62 = arith.constant -1.000000e+30 : f32
      %cst_63 = arith.constant 0.000000e+00 : f32
      %173 = vector.broadcast %cst_62 : f32 to vector<1x8xf32>
      %174 = vector.broadcast %cst_63 : f32 to vector<1x8xf32>
      %175 = arith.select %172, %173, %174 : vector<1x8xi1>, vector<1x8xf32>
      %c0_64 = arith.constant 0 : index
      %c0_65 = arith.constant 0 : index
      %176 = vector.load %arg15[%c0_64, %c0_65] : memref<2x8xf32, #tpu.memory_space<vmem>>, vector<1x8xf32>
      tpu.vector_store %arg15[%c0_64, %c0_65], %175 {strides = array<i32>} : memref<2x8xf32, #tpu.memory_space<vmem>>, vector<1x8xf32>,
      %c2_i32_66 = arith.constant 2 : i32
      %177 = arith.muli %arg0, %c2_i32_66 : i32
      %c1_i32 = arith.constant 1 : i32
      %178 = arith.addi %177, %c1_i32 : i32
      %179 = arith.index_cast %178 : i32 to index
      %180 = memref.load %arg2[%179] : memref<2xi32, #tpu.memory_space<smem>>
      %181 = vector.broadcast %180 : i32 to vector<1x8xi32>
      %182 = arith.cmpi sge, %166, %181 : vector<1x8xi32>
      %cst_67 = arith.constant -1.000000e+30 : f32
      %cst_68 = arith.constant 0.000000e+00 : f32
      %183 = vector.broadcast %cst_67 : f32 to vector<1x8xf32>
      %184 = vector.broadcast %cst_68 : f32 to vector<1x8xf32>
      %185 = arith.select %182, %183, %184 : vector<1x8xi1>, vector<1x8xf32>
      %c1 = arith.constant 1 : index
      %c0_69 = arith.constant 0 : index
      %186 = vector.load %arg15[%c1, %c0_69] : memref<2x8xf32, #tpu.memory_space<vmem>>, vector<1x8xf32>
      tpu.vector_store %arg15[%c1, %c0_69], %185 {strides = array<i32>} : memref<2x8xf32, #tpu.memory_space<vmem>>, vector<1x8xf32>,
    } else {
    }
    %c0 = arith.constant 0 : index
    %c0_1 = arith.constant 0 : index
    %c0_2 = arith.constant 0 : index
    %3 = vector.load %arg14[%c0, %c0_1, %c0_2] : memref<2x8x128xf32, #tpu.memory_space<vmem>>, vector<2x8x128xf32>
    %cst = arith.constant dense<0.000000e+00> : vector<2x8xf32>
    %4 = vector.multi_reduction <add>, %3, %cst [2] : vector<2x8x128xf32> to vector<2x8xf32>
    %5 = vector.shape_cast %4 : vector<2x8xf32> to vector<2x8x1xf32>
    %cst_3 = arith.constant 1.280000e+02 : f32
    %6 = vector.broadcast %cst_3 : f32 to vector<2x8x1xf32>
    %7 = arith.divf %5, %6 : vector<2x8x1xf32>
    %8 = vector.broadcast %7 : vector<2x8x1xf32> to vector<2x8x128xf32>
    %9 = arith.subf %3, %8 : vector<2x8x128xf32>
    %10 = arith.mulf %9, %9 : vector<2x8x128xf32>
    %cst_4 = arith.constant dense<0.000000e+00> : vector<2x8xf32>
    %11 = vector.multi_reduction <add>, %10, %cst_4 [2] : vector<2x8x128xf32> to vector<2x8xf32>
    %12 = vector.shape_cast %11 : vector<2x8xf32> to vector<2x8x1xf32>
    %cst_5 = arith.constant 1.280000e+02 : f32
    %13 = vector.broadcast %cst_5 : f32 to vector<2x8x1xf32>
    %14 = arith.divf %12, %13 : vector<2x8x1xf32>
    %15 = vector.broadcast %7 : vector<2x8x1xf32> to vector<2x8x128xf32>
    %16 = arith.subf %3, %15 : vector<2x8x128xf32>
    %cst_6 = arith.constant 9.99999974E-6 : f32
    %17 = vector.broadcast %cst_6 : f32 to vector<2x8x1xf32>
    %18 = arith.addf %14, %17 : vector<2x8x1xf32>
    %19 = math.rsqrt %18 : vector<2x8x1xf32>
    %20 = vector.broadcast %19 : vector<2x8x1xf32> to vector<2x8x128xf32>
    %21 = arith.mulf %16, %20 : vector<2x8x128xf32>
    %c0_7 = arith.constant 0 : index
    %c0_8 = arith.constant 0 : index
    %c0_9 = arith.constant 0 : index
    %22 = vector.load %arg4[%c0_7, %c0_8, %c0_9] : memref<1x1x128xf32, #tpu.memory_space<vmem>>, vector<1x1x128xf32>
    %23 = vector.shape_cast %22 : vector<1x1x128xf32> to vector<1x128xf32>
    %24 = vector.shape_cast %23 : vector<1x128xf32> to vector<1x1x128xf32>
    %25 = vector.broadcast %24 : vector<1x1x128xf32> to vector<2x8x128xf32>
    %26 = arith.mulf %21, %25 : vector<2x8x128xf32>
    %c0_10 = arith.constant 0 : index
    %c0_11 = arith.constant 0 : index
    %c0_12 = arith.constant 0 : index
    %27 = vector.load %arg5[%c0_10, %c0_11, %c0_12] : memref<1x1x128xf32, #tpu.memory_space<vmem>>, vector<1x1x128xf32>
    %28 = vector.shape_cast %27 : vector<1x1x128xf32> to vector<1x128xf32>
    %29 = vector.shape_cast %28 : vector<1x128xf32> to vector<1x1x128xf32>
    %30 = vector.broadcast %29 : vector<1x1x128xf32> to vector<2x8x128xf32>
    %31 = arith.addf %26, %30 : vector<2x8x128xf32>
    %32 = vector.shape_cast %31 : vector<2x8x128xf32> to vector<16x128xf32>
    %33 = arith.truncf %32 : vector<16x128xf32> to vector<16x128xbf16>
    %c0_13 = arith.constant 0 : index
    %c0_14 = arith.constant 0 : index
    %c0_15 = arith.constant 0 : index
    %34 = vector.load %arg6[%c0_13, %c0_14, %c0_15] : memref<1x128x384xbf16, #tpu.memory_space<vmem>>, vector<1x128x384xbf16>
    %35 = vector.shape_cast %34 : vector<1x128x384xbf16> to vector<128x384xbf16>
    %cst_16 = arith.constant dense<0.000000e+00> : vector<16x384xf32>
    %36 = tpu.matmul %33, %35, %cst_16 {dimension_numbers = #tpu.dot_dimension_numbers<[1], [0], [0], [1], [0, 0, 1, 1], [], []>} : vector<16x128xbf16>, vector<128x384xbf16>, vector<16x384xf32> -> vector<16x384xf32>
    %c0_17 = arith.constant 0 : index
    %c0_18 = arith.constant 0 : index
    %c0_19 = arith.constant 0 : index
    %37 = vector.load %arg7[%c0_17, %c0_18, %c0_19] : memref<1x1x384xf32, #tpu.memory_space<vmem>>, vector<1x1x384xf32>
    %38 = vector.shape_cast %37 : vector<1x1x384xf32> to vector<1x384xf32>
    %39 = vector.broadcast %38 : vector<1x384xf32> to vector<16x384xf32>
    %40 = arith.addf %36, %39 : vector<16x384xf32>
    %41 = vector.extract_strided_slice %40 {offsets = [0, 0], sizes = [16, 128], strides = [1, 1]} : vector<16x384xf32> to vector<16x128xf32>
    %42 = arith.truncf %41 : vector<16x128xf32> to vector<16x128xbf16>
    %43 = vector.extract_strided_slice %40 {offsets = [0, 128], sizes = [16, 128], strides = [1, 1]} : vector<16x384xf32> to vector<16x128xf32>
    %44 = arith.truncf %43 : vector<16x128xf32> to vector<16x128xbf16>
    %45 = vector.extract_strided_slice %40 {offsets = [0, 256], sizes = [16, 128], strides = [1, 1]} : vector<16x384xf32> to vector<16x128xf32>
    %46 = arith.truncf %45 : vector<16x128xf32> to vector<16x128xbf16>
    %47 = vector.extract_strided_slice %42 {offsets = [0, 0], sizes = [16, 32], strides = [1, 1]} : vector<16x128xbf16> to vector<16x32xbf16>
    %48 = vector.extract_strided_slice %42 {offsets = [0, 32], sizes = [16, 32], strides = [1, 1]} : vector<16x128xbf16> to vector<16x32xbf16>
    %49 = vector.extract_strided_slice %42 {offsets = [0, 64], sizes = [16, 32], strides = [1, 1]} : vector<16x128xbf16> to vector<16x32xbf16>
    %50 = vector.extract_strided_slice %42 {offsets = [0, 96], sizes = [16, 32], strides = [1, 1]} : vector<16x128xbf16> to vector<16x32xbf16>
    %51 = vector.shape_cast %47 : vector<16x32xbf16> to vector<1x16x32xbf16>
    %52 = vector.shape_cast %48 : vector<16x32xbf16> to vector<1x16x32xbf16>
    %53 = vector.shape_cast %49 : vector<16x32xbf16> to vector<1x16x32xbf16>
    %54 = vector.shape_cast %50 : vector<16x32xbf16> to vector<1x16x32xbf16>
    %55 = tpu.concatenate %51, %52, %53, %54 in 0 : vector<1x16x32xbf16>, vector<1x16x32xbf16>, vector<1x16x32xbf16>, vector<1x16x32xbf16> -> vector<4x16x32xbf16>
    %56 = vector.extract_strided_slice %44 {offsets = [0, 0], sizes = [16, 32], strides = [1, 1]} : vector<16x128xbf16> to vector<16x32xbf16>
    %57 = vector.extract_strided_slice %44 {offsets = [0, 32], sizes = [16, 32], strides = [1, 1]} : vector<16x128xbf16> to vector<16x32xbf16>
    %58 = vector.extract_strided_slice %44 {offsets = [0, 64], sizes = [16, 32], strides = [1, 1]} : vector<16x128xbf16> to vector<16x32xbf16>
    %59 = vector.extract_strided_slice %44 {offsets = [0, 96], sizes = [16, 32], strides = [1, 1]} : vector<16x128xbf16> to vector<16x32xbf16>
    %60 = vector.shape_cast %56 : vector<16x32xbf16> to vector<1x16x32xbf16>
    %61 = vector.shape_cast %57 : vector<16x32xbf16> to vector<1x16x32xbf16>
    %62 = vector.shape_cast %58 : vector<16x32xbf16> to vector<1x16x32xbf16>
    %63 = vector.shape_cast %59 : vector<16x32xbf16> to vector<1x16x32xbf16>
    %64 = tpu.concatenate %60, %61, %62, %63 in 0 : vector<1x16x32xbf16>, vector<1x16x32xbf16>, vector<1x16x32xbf16>, vector<1x16x32xbf16> -> vector<4x16x32xbf16>
    %65 = vector.extract_strided_slice %46 {offsets = [0, 0], sizes = [16, 32], strides = [1, 1]} : vector<16x128xbf16> to vector<16x32xbf16>
    %66 = vector.extract_strided_slice %46 {offsets = [0, 32], sizes = [16, 32], strides = [1, 1]} : vector<16x128xbf16> to vector<16x32xbf16>
    %67 = vector.extract_strided_slice %46 {offsets = [0, 64], sizes = [16, 32], strides = [1, 1]} : vector<16x128xbf16> to vector<16x32xbf16>
    %68 = vector.extract_strided_slice %46 {offsets = [0, 96], sizes = [16, 32], strides = [1, 1]} : vector<16x128xbf16> to vector<16x32xbf16>
    %69 = vector.shape_cast %65 : vector<16x32xbf16> to vector<1x16x32xbf16>
    %70 = vector.shape_cast %66 : vector<16x32xbf16> to vector<1x16x32xbf16>
    %71 = vector.shape_cast %67 : vector<16x32xbf16> to vector<1x16x32xbf16>
    %72 = vector.shape_cast %68 : vector<16x32xbf16> to vector<1x16x32xbf16>
    %73 = tpu.concatenate %69, %70, %71, %72 in 0 : vector<1x16x32xbf16>, vector<1x16x32xbf16>, vector<1x16x32xbf16>, vector<1x16x32xbf16> -> vector<4x16x32xbf16>
    %c0_20 = arith.constant 0 : index
    %c0_21 = arith.constant 0 : index
    %74 = vector.load %arg15[%c0_20, %c0_21] : memref<2x8xf32, #tpu.memory_space<vmem>>, vector<2x8xf32>
    %75 = vector.extract_strided_slice %55 {offsets = [0, 0, 0], sizes = [4, 8, 32], strides = [1, 1, 1]} : vector<4x16x32xbf16> to vector<4x8x32xbf16>
    %76 = vector.extract_strided_slice %64 {offsets = [0, 0, 0], sizes = [4, 8, 32], strides = [1, 1, 1]} : vector<4x16x32xbf16> to vector<4x8x32xbf16>
    %77 = vector.extract_strided_slice %73 {offsets = [0, 0, 0], sizes = [4, 8, 32], strides = [1, 1, 1]} : vector<4x16x32xbf16> to vector<4x8x32xbf16>
    "tpu.trace_start"() <{level = 10 : i32, message = "hqd,hkd->hqk"}> : () -> ()
    %cst_22 = arith.constant dense<0.000000e+00> : vector<4x8x8xf32>
    %78 = tpu.matmul %75, %76, %cst_22 {dimension_numbers = #tpu.dot_dimension_numbers<[2], [2], [1], [1], [0, 0, 0, 1, 1, 1], [0], [0]>} : vector<4x8x32xbf16>, vector<4x8x32xbf16>, vector<4x8x8xf32> -> vector<4x8x8xf32>
    "tpu.trace_stop"() : () -> ()
    %79 = vector.extract_strided_slice %74 {offsets = [0, 0], sizes = [1, 8], strides = [1, 1]} : vector<2x8xf32> to vector<1x8xf32>
    %80 = vector.shape_cast %79 : vector<1x8xf32> to vector<1x1x8xf32>
    %81 = vector.broadcast %80 : vector<1x1x8xf32> to vector<4x8x8xf32>
    %82 = arith.addf %78, %81 : vector<4x8x8xf32>
    %cst_23 = arith.constant dense<0xFF800000> : vector<4x8xf32>
    %83 = vector.multi_reduction <maximumf>, %82, %cst_23 [2] : vector<4x8x8xf32> to vector<4x8xf32>
    %84 = vector.shape_cast %83 : vector<4x8xf32> to vector<4x8x1xf32>
    %85 = vector.broadcast %84 : vector<4x8x1xf32> to vector<4x8x8xf32>
    %86 = arith.subf %82, %85 : vector<4x8x8xf32>
    %87 = math.exp %86 : vector<4x8x8xf32>
    %cst_24 = arith.constant dense<0.000000e+00> : vector<4x8xf32>
    %88 = vector.multi_reduction <add>, %87, %cst_24 [2] : vector<4x8x8xf32> to vector<4x8xf32>
    %89 = vector.shape_cast %88 : vector<4x8xf32> to vector<4x8x1xf32>
    %90 = tpu.reciprocal %89 {approx = true} : vector<4x8x1xf32> -> vector<4x8x1xf32>
    %91 = vector.broadcast %90 : vector<4x8x1xf32> to vector<4x8x8xf32>
    %92 = arith.mulf %87, %91 : vector<4x8x8xf32>
    %93 = arith.truncf %92 : vector<4x8x8xf32> to vector<4x8x8xbf16>
    "tpu.trace_start"() <{level = 10 : i32, message = "hqk,hkd->hqd"}> : () -> ()
    %cst_25 = arith.constant dense<0.000000e+00> : vector<4x8x32xf32>
    %94 = tpu.matmul %93, %77, %cst_25 {dimension_numbers = #tpu.dot_dimension_numbers<[2], [1], [1], [2], [0, 0, 0, 1, 1, 2], [0], [0]>} : vector<4x8x8xbf16>, vector<4x8x32xbf16>, vector<4x8x32xf32> -> vector<4x8x32xf32>
    "tpu.trace_stop"() : () -> ()
    %95 = vector.extract_strided_slice %94 {offsets = [0, 0, 0], sizes = [1, 8, 32], strides = [1, 1, 1]} : vector<4x8x32xf32> to vector<1x8x32xf32>
    %96 = vector.shape_cast %95 : vector<1x8x32xf32> to vector<8x32xf32>
    %97 = vector.extract_strided_slice %94 {offsets = [1, 0, 0], sizes = [1, 8, 32], strides = [1, 1, 1]} : vector<4x8x32xf32> to vector<1x8x32xf32>
    %98 = vector.shape_cast %97 : vector<1x8x32xf32> to vector<8x32xf32>
    %99 = vector.extract_strided_slice %94 {offsets = [2, 0, 0], sizes = [1, 8, 32], strides = [1, 1, 1]} : vector<4x8x32xf32> to vector<1x8x32xf32>
    %100 = vector.shape_cast %99 : vector<1x8x32xf32> to vector<8x32xf32>
    %101 = vector.extract_strided_slice %94 {offsets = [3, 0, 0], sizes = [1, 8, 32], strides = [1, 1, 1]} : vector<4x8x32xf32> to vector<1x8x32xf32>
    %102 = vector.shape_cast %101 : vector<1x8x32xf32> to vector<8x32xf32>
    %103 = tpu.concatenate %96, %98, %100, %102 in 1 : vector<8x32xf32>, vector<8x32xf32>, vector<8x32xf32>, vector<8x32xf32> -> vector<8x128xf32>
    %104 = vector.extract_strided_slice %55 {offsets = [0, 8, 0], sizes = [4, 8, 32], strides = [1, 1, 1]} : vector<4x16x32xbf16> to vector<4x8x32xbf16>
    %105 = vector.extract_strided_slice %64 {offsets = [0, 8, 0], sizes = [4, 8, 32], strides = [1, 1, 1]} : vector<4x16x32xbf16> to vector<4x8x32xbf16>
    %106 = vector.extract_strided_slice %73 {offsets = [0, 8, 0], sizes = [4, 8, 32], strides = [1, 1, 1]} : vector<4x16x32xbf16> to vector<4x8x32xbf16>
    "tpu.trace_start"() <{level = 10 : i32, message = "hqd,hkd->hqk"}> : () -> ()
    %cst_26 = arith.constant dense<0.000000e+00> : vector<4x8x8xf32>
    %107 = tpu.matmul %104, %105, %cst_26 {dimension_numbers = #tpu.dot_dimension_numbers<[2], [2], [1], [1], [0, 0, 0, 1, 1, 1], [0], [0]>} : vector<4x8x32xbf16>, vector<4x8x32xbf16>, vector<4x8x8xf32> -> vector<4x8x8xf32>
    "tpu.trace_stop"() : () -> ()
    %108 = vector.extract_strided_slice %74 {offsets = [1, 0], sizes = [1, 8], strides = [1, 1]} : vector<2x8xf32> to vector<1x8xf32>
    %109 = vector.shape_cast %108 : vector<1x8xf32> to vector<1x1x8xf32>
    %110 = vector.broadcast %109 : vector<1x1x8xf32> to vector<4x8x8xf32>
    %111 = arith.addf %107, %110 : vector<4x8x8xf32>
    %cst_27 = arith.constant dense<0xFF800000> : vector<4x8xf32>
    %112 = vector.multi_reduction <maximumf>, %111, %cst_27 [2] : vector<4x8x8xf32> to vector<4x8xf32>
    %113 = vector.shape_cast %112 : vector<4x8xf32> to vector<4x8x1xf32>
    %114 = vector.broadcast %113 : vector<4x8x1xf32> to vector<4x8x8xf32>
    %115 = arith.subf %111, %114 : vector<4x8x8xf32>
    %116 = math.exp %115 : vector<4x8x8xf32>
    %cst_28 = arith.constant dense<0.000000e+00> : vector<4x8xf32>
    %117 = vector.multi_reduction <add>, %116, %cst_28 [2] : vector<4x8x8xf32> to vector<4x8xf32>
    %118 = vector.shape_cast %117 : vector<4x8xf32> to vector<4x8x1xf32>
    %119 = tpu.reciprocal %118 {approx = true} : vector<4x8x1xf32> -> vector<4x8x1xf32>
    %120 = vector.broadcast %119 : vector<4x8x1xf32> to vector<4x8x8xf32>
    %121 = arith.mulf %116, %120 : vector<4x8x8xf32>
    %122 = arith.truncf %121 : vector<4x8x8xf32> to vector<4x8x8xbf16>
    "tpu.trace_start"() <{level = 10 : i32, message = "hqk,hkd->hqd"}> : () -> ()
    %cst_29 = arith.constant dense<0.000000e+00> : vector<4x8x32xf32>
    %123 = tpu.matmul %122, %106, %cst_29 {dimension_numbers = #tpu.dot_dimension_numbers<[2], [1], [1], [2], [0, 0, 0, 1, 1, 2], [0], [0]>} : vector<4x8x8xbf16>, vector<4x8x32xbf16>, vector<4x8x32xf32> -> vector<4x8x32xf32>
    "tpu.trace_stop"() : () -> ()
    %124 = vector.extract_strided_slice %123 {offsets = [0, 0, 0], sizes = [1, 8, 32], strides = [1, 1, 1]} : vector<4x8x32xf32> to vector<1x8x32xf32>
    %125 = vector.shape_cast %124 : vector<1x8x32xf32> to vector<8x32xf32>
    %126 = vector.extract_strided_slice %123 {offsets = [1, 0, 0], sizes = [1, 8, 32], strides = [1, 1, 1]} : vector<4x8x32xf32> to vector<1x8x32xf32>
    %127 = vector.shape_cast %126 : vector<1x8x32xf32> to vector<8x32xf32>
    %128 = vector.extract_strided_slice %123 {offsets = [2, 0, 0], sizes = [1, 8, 32], strides = [1, 1, 1]} : vector<4x8x32xf32> to vector<1x8x32xf32>
    %129 = vector.shape_cast %128 : vector<1x8x32xf32> to vector<8x32xf32>
    %130 = vector.extract_strided_slice %123 {offsets = [3, 0, 0], sizes = [1, 8, 32], strides = [1, 1, 1]} : vector<4x8x32xf32> to vector<1x8x32xf32>
    %131 = vector.shape_cast %130 : vector<1x8x32xf32> to vector<8x32xf32>
    %132 = tpu.concatenate %125, %127, %129, %131 in 1 : vector<8x32xf32>, vector<8x32xf32>, vector<8x32xf32>, vector<8x32xf32> -> vector<8x128xf32>
    %133 = tpu.concatenate %103, %132 in 0 : vector<8x128xf32>, vector<8x128xf32> -> vector<16x128xf32>
    %134 = arith.truncf %133 : vector<16x128xf32> to vector<16x128xbf16>
    %c0_30 = arith.constant 0 : index
    %c0_31 = arith.constant 0 : index
    %c0_32 = arith.constant 0 : index
    %135 = vector.load %arg8[%c0_30, %c0_31, %c0_32] : memref<1x128x128xbf16, #tpu.memory_space<vmem>>, vector<1x128x128xbf16>
    %136 = vector.shape_cast %135 : vector<1x128x128xbf16> to vector<128x128xbf16>
    %cst_33 = arith.constant dense<0.000000e+00> : vector<16x128xf32>
    %137 = tpu.matmul %134, %136, %cst_33 {dimension_numbers = #tpu.dot_dimension_numbers<[1], [0], [0], [1], [0, 0, 1, 1], [], []>} : vector<16x128xbf16>, vector<128x128xbf16>, vector<16x128xf32> -> vector<16x128xf32>
    %c0_34 = arith.constant 0 : index
    %c0_35 = arith.constant 0 : index
    %c0_36 = arith.constant 0 : index
    %138 = vector.load %arg9[%c0_34, %c0_35, %c0_36] : memref<1x1x128xf32, #tpu.memory_space<vmem>>, vector<1x1x128xf32>
    %139 = vector.shape_cast %138 : vector<1x1x128xf32> to vector<1x128xf32>
    %140 = vector.broadcast %139 : vector<1x128xf32> to vector<16x128xf32>
    %141 = arith.addf %137, %140 : vector<16x128xf32>
    %142 = arith.addf %141, %32 : vector<16x128xf32>
    %143 = arith.truncf %142 : vector<16x128xf32> to vector<16x128xbf16>
    %c0_37 = arith.constant 0 : index
    %c0_38 = arith.constant 0 : index
    %c0_39 = arith.constant 0 : index
    %144 = vector.load %arg10[%c0_37, %c0_38, %c0_39] : memref<1x128x256xbf16, #tpu.memory_space<vmem>>, vector<1x128x256xbf16>
    %145 = vector.shape_cast %144 : vector<1x128x256xbf16> to vector<128x256xbf16>
    %cst_40 = arith.constant dense<0.000000e+00> : vector<16x256xf32>
    %146 = tpu.matmul %143, %145, %cst_40 {dimension_numbers = #tpu.dot_dimension_numbers<[1], [0], [0], [1], [0, 0, 1, 1], [], []>} : vector<16x128xbf16>, vector<128x256xbf16>, vector<16x256xf32> -> vector<16x256xf32>
    %c0_41 = arith.constant 0 : index
    %c0_42 = arith.constant 0 : index
    %c0_43 = arith.constant 0 : index
    %147 = vector.load %arg11[%c0_41, %c0_42, %c0_43] : memref<1x1x256xf32, #tpu.memory_space<vmem>>, vector<1x1x256xf32>
    %148 = vector.shape_cast %147 : vector<1x1x256xf32> to vector<1x256xf32>
    %149 = vector.broadcast %148 : vector<1x256xf32> to vector<16x256xf32>
    %150 = arith.addf %146, %149 : vector<16x256xf32>
    %cst_44 = arith.constant 0.000000e+00 : f32
    %151 = vector.broadcast %cst_44 : f32 to vector<16x256xf32>
    %152 = arith.maximumf %150, %151 : vector<16x256xf32>
    %153 = arith.truncf %152 : vector<16x256xf32> to vector<16x256xbf16>
    %c0_45 = arith.constant 0 : index
    %c0_46 = arith.constant 0 : index
    %c0_47 = arith.constant 0 : index
    %154 = vector.load %arg12[%c0_45, %c0_46, %c0_47] : memref<1x256x128xbf16, #tpu.memory_space<vmem>>, vector<1x256x128xbf16>
    %155 = vector.shape_cast %154 : vector<1x256x128xbf16> to vector<256x128xbf16>
    %cst_48 = arith.constant dense<0.000000e+00> : vector<16x128xf32>
    %156 = tpu.matmul %153, %155, %cst_48 {dimension_numbers = #tpu.dot_dimension_numbers<[1], [0], [0], [1], [0, 0, 1, 1], [], []>} : vector<16x256xbf16>, vector<256x128xbf16>, vector<16x128xf32> -> vector<16x128xf32>
    %c0_49 = arith.constant 0 : index
    %c0_50 = arith.constant 0 : index
    %c0_51 = arith.constant 0 : index
    %157 = vector.load %arg13[%c0_49, %c0_50, %c0_51] : memref<1x1x128xf32, #tpu.memory_space<vmem>>, vector<1x1x128xf32>
    %158 = vector.shape_cast %157 : vector<1x1x128xf32> to vector<1x128xf32>
    %159 = vector.broadcast %158 : vector<1x128xf32> to vector<16x128xf32>
    %160 = arith.addf %156, %159 : vector<16x128xf32>
    %161 = arith.addf %160, %142 : vector<16x128xf32>
    %162 = vector.shape_cast %161 : vector<16x128xf32> to vector<2x8x128xf32>
    %c0_52 = arith.constant 0 : index
    %c0_53 = arith.constant 0 : index
    %c0_54 = arith.constant 0 : index
    %163 = vector.load %arg14[%c0_52, %c0_53, %c0_54] : memref<2x8x128xf32, #tpu.memory_space<vmem>>, vector<2x8x128xf32>
    tpu.vector_store %arg14[%c0_52, %c0_53, %c0_54], %162 {strides = array<i32>} : memref<2x8x128xf32, #tpu.memory_space<vmem>>, vector<2x8x128xf32>,
    return
  }
  func.func @transform_0(%arg0: i32, %arg1: i32, %arg2: memref<2xi32, #tpu.memory_space<smem>>) -> (i32, i32, i32) {
    %c0_i32 = arith.constant 0 : i32
    %c0_i32_0 = arith.constant 0 : i32
    %c0_i32_1 = arith.constant 0 : i32
    return %arg0, %c0_i32, %c0_i32_0 : i32, i32, i32
  }
  func.func @transform_1(%arg0: i32, %arg1: i32, %arg2: memref<2xi32, #tpu.memory_space<smem>>) -> (i32, i32, i32) {
    %c0_i32 = arith.constant 0 : i32
    %c0_i32_0 = arith.constant 0 : i32
    %c0_i32_1 = arith.constant 0 : i32
    return %arg1, %c0_i32, %c0_i32_0 : i32, i32, i32
  }
  func.func @transform_2(%arg0: i32, %arg1: i32, %arg2: memref<2xi32, #tpu.memory_space<smem>>) -> (i32, i32, i32) {
    %c0_i32 = arith.constant 0 : i32
    %c0_i32_0 = arith.constant 0 : i32
    %c0_i32_1 = arith.constant 0 : i32
    return %arg1, %c0_i32, %c0_i32_0 : i32, i32, i32
  }
  func.func @transform_3(%arg0: i32, %arg1: i32, %arg2: memref<2xi32, #tpu.memory_space<smem>>) -> (i32, i32, i32) {
    %c0_i32 = arith.constant 0 : i32
    %c0_i32_0 = arith.constant 0 : i32
    %c0_i32_1 = arith.constant 0 : i32
    return %arg1, %c0_i32, %c0_i32_0 : i32, i32, i32
  }
  func.func @transform_4(%arg0: i32, %arg1: i32, %arg2: memref<2xi32, #tpu.memory_space<smem>>) -> (i32, i32, i32) {
    %c0_i32 = arith.constant 0 : i32
    %c0_i32_0 = arith.constant 0 : i32
    %c0_i32_1 = arith.constant 0 : i32
    return %arg1, %c0_i32, %c0_i32_0 : i32, i32, i32
  }
  func.func @transform_5(%arg0: i32, %arg1: i32, %arg2: memref<2xi32, #tpu.memory_space<smem>>) -> (i32, i32, i32) {
    %c0_i32 = arith.constant 0 : i32
    %c0_i32_0 = arith.constant 0 : i32
    %c0_i32_1 = arith.constant 0 : i32
    return %arg1, %c0_i32, %c0_i32_0 : i32, i32, i32
  }
  func.func @transform_6(%arg0: i32, %arg1: i32, %arg2: memref<2xi32, #tpu.memory_space<smem>>) -> (i32, i32, i32) {
    %c0_i32 = arith.constant 0 : i32
    %c0_i32_0 = arith.constant 0 : i32
    %c0_i32_1 = arith.constant 0 : i32
    return %arg1, %c0_i32, %c0_i32_0 : i32, i32, i32
  }
  func.func @transform_7(%arg0: i32, %arg1: i32, %arg2: memref<2xi32, #tpu.memory_space<smem>>) -> (i32, i32, i32) {
    %c0_i32 = arith.constant 0 : i32
    %c0_i32_0 = arith.constant 0 : i32
    %c0_i32_1 = arith.constant 0 : i32
    return %arg1, %c0_i32, %c0_i32_0 : i32, i32, i32
  }
  func.func @transform_8(%arg0: i32, %arg1: i32, %arg2: memref<2xi32, #tpu.memory_space<smem>>) -> (i32, i32, i32) {
    %c0_i32 = arith.constant 0 : i32
    %c0_i32_0 = arith.constant 0 : i32
    %c0_i32_1 = arith.constant 0 : i32
    return %arg1, %c0_i32, %c0_i32_0 : i32, i32, i32
  }
  func.func @transform_9(%arg0: i32, %arg1: i32, %arg2: memref<2xi32, #tpu.memory_space<smem>>) -> (i32, i32, i32) {
    %c0_i32 = arith.constant 0 : i32
    %c0_i32_0 = arith.constant 0 : i32
    %c0_i32_1 = arith.constant 0 : i32
    return %arg1, %c0_i32, %c0_i32_0 : i32, i32, i32
  }
  func.func @transform_10(%arg0: i32, %arg1: i32, %arg2: memref<2xi32, #tpu.memory_space<smem>>) -> (i32, i32, i32) {
    %c0_i32 = arith.constant 0 : i32
    %c0_i32_0 = arith.constant 0 : i32
    %c0_i32_1 = arith.constant 0 : i32
    return %arg1, %c0_i32, %c0_i32_0 : i32, i32, i32
  }
  func.func @transform_11(%arg0: i32, %arg1: i32, %arg2: memref<2xi32, #tpu.memory_space<smem>>) -> (i32, i32, i32) {
    %c0_i32 = arith.constant 0 : i32
    %c0_i32_0 = arith.constant 0 : i32
    %c0_i32_1 = arith.constant 0 : i32
    return %arg0, %c0_i32, %c0_i32_0 : i32, i32, i32
  }
}

</mosaic_0001>

<llo_original>
// kernel: tpu_custom_call.1
$region0: #{tpu_custom_call.1}
  #allocation0 [shape = 'u32[]', space=smem, size = 0x4, offset = 0x4, fixed_abs, tag = 'smem constant byte address 0x4 - core index']
  #allocation1 [shape = 'u32[144,128]{1,0:T(1,128)}', space=vmem, size = 0x12000, scoped, tag = 'internal scratch']
  #allocation2 [shape = 'f32[2,8]{1,0:T(2,128)}', space=vmem, size = 0x400, scoped, tag = 'scratch operand']
  #allocation3 [shape = 's32[1]{0}', space=sflag, size = 0x4, scoped, tag = 'scoped memory for tpu_custom_call.1']
  #allocation4 [shape = 'u8[512]{0}', space=smem, size = 0x200, scoped, tag = 'prefetched SMEM operand 0']
  %s0 = inlined_call_operand.hbm [shape: s32[2], index: 0, kind: input, shape index: {}]
  %s1 = inlined_call_operand.hbm [shape: f32[2,8,128], index: 1, kind: input, shape index: {}]
  %s2 = inlined_call_operand.hbm [shape: f32[2,1,128], index: 2, kind: input, shape index: {}]
  %s3 = inlined_call_operand.hbm [shape: f32[2,1,128], index: 3, kind: input, shape index: {}]
  %s4 = inlined_call_operand.hbm [shape: bf16[2,128,384], index: 4, kind: input, shape index: {}]
  %s5 = inlined_call_operand.vmem [shape: f32[2,1,384], index: 5, kind: input, shape index: {}]
  %s6 = inlined_call_operand.hbm [shape: bf16[2,128,128], index: 6, kind: input, shape index: {}]
  %s7 = inlined_call_operand.vmem [shape: f32[2,1,128], index: 7, kind: input, shape index: {}]
  %s8 = inlined_call_operand.hbm [shape: bf16[2,128,256], index: 8, kind: input, shape index: {}]
  %s9 = inlined_call_operand.vmem [shape: f32[2,1,256], index: 9, kind: input, shape index: {}]
  %s10 = inlined_call_operand.hbm [shape: bf16[2,256,128], index: 10, kind: input, shape index: {}]
  %s11 = inlined_call_operand.vmem [shape: f32[2,1,128], index: 11, kind: input, shape index: {}]
  %s12 = inlined_call_operand.hbm [shape: f32[2,8,128], index: 12, kind: output, shape index: {}]
  %s13 = sld [smem:[#allocation0]]
  $region109: #{tpu_custom_call.1} parent=0
    _
  %s15 = ssub.s32 1, %s13
  %s16 = scalar_select 0, %s15, %s13
  %18 = dma.hbm_to_smem %s0, 16, [#allocation4], [#allocation3]
  %19 = dma.done [#allocation3], 16
  %20 = sfence
  $region1: #{tpu_custom_call.1} parent=0
    #allocation5 [shape = 'u8[8192]{0}', space=vmem, size = 0x2000, scoped, tag = 'input window, operand 1, single buffered']
    #allocation6 [shape = 's32[2]{0}', space=sflag, size = 0x8, scoped, tag = 'scoped memory for tpu_custom_call.1']
    #allocation7 [shape = 's32[2]{0}', space=sflag, size = 0x8, scoped, tag = 'scoped memory for tpu_custom_call.1']
    #allocation8 [shape = 'u8[1024]{0}', space=vmem, size = 0x400, scoped, tag = 'input window, operand 2']
    #allocation9 [shape = 's32[2]{0}', space=sflag, size = 0x8, scoped, tag = 'scoped memory for tpu_custom_call.1']
    #allocation10 [shape = 'u8[1024]{0}', space=vmem, size = 0x400, scoped, tag = 'input window, operand 3']
    #allocation11 [shape = 'u8[196608]{0}', space=vmem, size = 0x30000, scoped, tag = 'input window, operand 4']
    #allocation12 [shape = 's32[2]{0}', space=sflag, size = 0x8, scoped, tag = 'scoped memory for tpu_custom_call.1']
    #allocation13 [shape = 'u8[65536]{0}', space=vmem, size = 0x10000, scoped, tag = 'input window, operand 6']
    #allocation14 [shape = 'u8[131072]{0}', space=vmem, size = 0x20000, scoped, tag = 'input window, operand 8']
    #allocation15 [shape = 's32[2]{0}', space=sflag, size = 0x8, scoped, tag = 'scoped memory for tpu_custom_call.1']
    #allocation16 [shape = 'u8[131072]{0}', space=vmem, size = 0x20000, scoped, tag = 'input window, operand 10']
    #allocation17 [shape = 'u8[8192]{0}', space=vmem, size = 0x2000, scoped, tag = 'output window, operand 0, single buffered']
    %21 = vsyncpa [#allocation6], 0
    %22 = vsyncpa [#allocation9], 0
    %s23 = scalar_lea.sflag [#allocation9], 1
    %24 = vsyncpa %s23, 0
    %25 = vsyncpa [#allocation12], 0
    %s26 = scalar_lea.sflag [#allocation12], 1
    %27 = vsyncpa %s26, 0
    %28 = vsyncpa [#allocation15], 0
    %s29 = scalar_lea.sflag [#allocation15], 1
    %30 = vsyncpa %s29, 0
    %31 = vsyncpa [#allocation7], 0
    loop: start=0, step=1, limit=4
    $region2: #{tpu_custom_call.1} parent=1 // loop_pre_header
      _
    $region3: #{tpu_custom_call.1} parent=1 // loop_header
      %s33 = sphi 0, %s37
      %p34 = scmp.ge.s32.totalorder %s33, 4
      %s40 = sphi 0, %s52
      %s41 = sphi 0, %s48
      %s42 = sphi 0, %s40
      %s43 = sphi 0, %s41
      %s44 = sphi 0, %s42
      %s45 = sphi 0, %s43
      %s55 = sphi 0, %s57
      %s58 = sphi 0, %s55
      %s59 = sphi 0, %s58
      %s75 = sphi 0, %s59
      %s81 = sphi 0, %s83
      %s84 = sphi 0, %s81
      %s85 = sphi 0, %s84
      %s101 = sphi 0, %s85
      %s107 = sphi 0, %s109
      %s110 = sphi 0, %s107
      %s111 = sphi 0, %s110
      %s127 = sphi 0, %s111
      %s133 = sphi 0, %s135
      %s136 = sphi 0, %s133
      %s137 = sphi 0, %s136
      %s153 = sphi 0, %s137
      %s159 = sphi 0, %s161
      %s162 = sphi 0, %s159
      %s163 = sphi 0, %s162
      %s179 = sphi 0, %s163
      %s185 = sphi 0, %s187
      %s188 = sphi 0, %s185
      %s189 = sphi 0, %s188
      %s205 = sphi 0, %s189
      %s211 = sphi 0, %s213
      %s214 = sphi 0, %s211
      %s215 = sphi 0, %s214
      %s231 = sphi 0, %s215
      %s237 = sphi 0, %s239
      %s240 = sphi 0, %s237
      %s241 = sphi 0, %s240
      %s257 = sphi 0, %s241
      %s263 = sphi 0, %s265
      %s266 = sphi 0, %s263
      %s267 = sphi 0, %s266
      %s283 = sphi 0, %s267
      %s289 = sphi 0, %s291
      %s292 = sphi 0, %s289
      %s293 = sphi 0, %s292
      %s309 = sphi 0, %s293
      %s315 = sphi 0, %s317
      %s318 = sphi 0, %s315
      %s319 = sphi 0, %s318
      %s335 = sphi 0, %s319
      %s341 = sphi 0, %s343
      %s344 = sphi 0, %s341
      %s345 = sphi 0, %s344
      %s361 = sphi 0, %s345
    $region4: #{tpu_custom_call.1} parent=1 // loop_header_branch
      %36 = sbr.rel (%p34) target = $region8
    $region5: #{tpu_custom_call.1} parent=1 // loop_body
      %s38 = ssub.s32 %s33, 1
      %s39 = ssub.s32 %s33, 2
      %s46 = sadd.s32 1, %s41
      %p47 = scmp.ge.s32.totalorder %s46, 2
      %s48 = scalar_select %p47, 0, %s46
      %s49 = sadd.s32 1, %s40
      %s50 = scalar_select %p47, %s49, %s40
      %p51 = scmp.ge.s32.totalorder %s50, 1
      %s52 = scalar_select %p51, 0, %s50
      %s53 = ssub.s32 %s40, %s52
      %p54 = scmp.eq.s32.totalorder %s53, 0
      %s56 = sadd.s32 %s55, 1
      %s57 = scalar_select %p54, %s55, %s56
      %p60 = pneg %p54
      %p61 = scmp.eq.s32.totalorder %s33, 1
      %p62 = por %p60, %p61
      %p63 = scmp.ne.s32.totalorder %s55, %s58
      %p64 = scmp.eq.s32.totalorder %s33, 0
      %p65 = por %p63, %p64
      %p66 = scmp.ne.s32.totalorder %s55, %s58
      %p67 = scmp.eq.s32.totalorder %s38, 1
      %p68 = por %p66, %p67
      %p69 = scmp.ne.s32.totalorder %s58, %s59
      %p70 = scmp.eq.s32.totalorder %s38, 0
      %p71 = por %p69, %p70
      %p72 = scmp.ne.s32.totalorder %s58, %s59
      %p73 = scmp.eq.s32.totalorder %s39, 1
      %p74 = por %p72, %p73
      %p76 = scmp.ne.s32.totalorder %s59, %s75
      %p77 = scmp.eq.s32.totalorder %s39, 0
      %p78 = por %p76, %p77
      %s79 = ssub.s32 %s41, %s48
      %p80 = scmp.eq.s32.totalorder %s79, 0
      %s82 = sadd.s32 %s81, 1
      %s83 = scalar_select %p80, %s81, %s82
      %p86 = pneg %p80
      %p87 = scmp.eq.s32.totalorder %s33, 1
      %p88 = por %p86, %p87
      %p89 = scmp.ne.s32.totalorder %s81, %s84
      %p90 = scmp.eq.s32.totalorder %s33, 0
      %p91 = por %p89, %p90
      %p92 = scmp.ne.s32.totalorder %s81, %s84
      %p93 = scmp.eq.s32.totalorder %s38, 1
      %p94 = por %p92, %p93
      %p95 = scmp.ne.s32.totalorder %s84, %s85
      %p96 = scmp.eq.s32.totalorder %s38, 0
      %p97 = por %p95, %p96
      %p98 = scmp.ne.s32.totalorder %s84, %s85
      %p99 = scmp.eq.s32.totalorder %s39, 1
      %p100 = por %p98, %p99
      %p102 = scmp.ne.s32.totalorder %s85, %s101
      %p103 = scmp.eq.s32.totalorder %s39, 0
      %p104 = por %p102, %p103
      %s105 = ssub.s32 %s41, %s48
      %p106 = scmp.eq.s32.totalorder %s105, 0
      %s108 = sadd.s32 %s107, 1
      %s109 = scalar_select %p106, %s107, %s108
      %p112 = pneg %p106
      %p113 = scmp.eq.s32.totalorder %s33, 1
      %p114 = por %p112, %p113
      %p115 = scmp.ne.s32.totalorder %s107, %s110
      %p116 = scmp.eq.s32.totalorder %s33, 0
      %p117 = por %p115, %p116
      %p118 = scmp.ne.s32.totalorder %s107, %s110
      %p119 = scmp.eq.s32.totalorder %s38, 1
      %p120 = por %p118, %p119
      %p121 = scmp.ne.s32.totalorder %s110, %s111
      %p122 = scmp.eq.s32.totalorder %s38, 0
      %p123 = por %p121, %p122
      %p124 = scmp.ne.s32.totalorder %s110, %s111
      %p125 = scmp.eq.s32.totalorder %s39, 1
      %p126 = por %p124, %p125
      %p128 = scmp.ne.s32.totalorder %s111, %s127
      %p129 = scmp.eq.s32.totalorder %s39, 0
      %p130 = por %p128, %p129
      %s131 = ssub.s32 %s41, %s48
      %p132 = scmp.eq.s32.totalorder %s131, 0
      %s134 = sadd.s32 %s133, 1
      %s135 = scalar_select %p132, %s133, %s134
      %p138 = pneg %p132
      %p139 = scmp.eq.s32.totalorder %s33, 1
      %p140 = por %p138, %p139
      %p141 = scmp.ne.s32.totalorder %s133, %s136
      %p142 = scmp.eq.s32.totalorder %s33, 0
      %p143 = por %p141, %p142
      %p144 = scmp.ne.s32.totalorder %s133, %s136
      %p145 = scmp.eq.s32.totalorder %s38, 1
      %p146 = por %p144, %p145
      %p147 = scmp.ne.s32.totalorder %s136, %s137
      %p148 = scmp.eq.s32.totalorder %s38, 0
      %p149 = por %p147, %p148
      %p150 = scmp.ne.s32.totalorder %s136, %s137
      %p151 = scmp.eq.s32.totalorder %s39, 1
      %p152 = por %p150, %p151
      %p154 = scmp.ne.s32.totalorder %s137, %s153
      %p155 = scmp.eq.s32.totalorder %s39, 0
      %p156 = por %p154, %p155
      %s157 = ssub.s32 %s41, %s48
      %p158 = scmp.eq.s32.totalorder %s157, 0
      %s160 = sadd.s32 %s159, 1
      %s161 = scalar_select %p158, %s159, %s160
      %p164 = pneg %p158
      %p165 = scmp.eq.s32.totalorder %s33, 1
      %p166 = por %p164, %p165
      %p167 = scmp.ne.s32.totalorder %s159, %s162
      %p168 = scmp.eq.s32.totalorder %s33, 0
      %p169 = por %p167, %p168
      %p170 = scmp.ne.s32.totalorder %s159, %s162
      %p171 = scmp.eq.s32.totalorder %s38, 1
      %p172 = por %p170, %p171
      %p173 = scmp.ne.s32.totalorder %s162, %s163
      %p174 = scmp.eq.s32.totalorder %s38, 0
      %p175 = por %p173, %p174
      %p176 = scmp.ne.s32.totalorder %s162, %s163
      %p177 = scmp.eq.s32.totalorder %s39, 1
      %p178 = por %p176, %p177
      %p180 = scmp.ne.s32.totalorder %s163, %s179
      %p181 = scmp.eq.s32.totalorder %s39, 0
      %p182 = por %p180, %p181
      %s183 = ssub.s32 %s41, %s48
      %p184 = scmp.eq.s32.totalorder %s183, 0
      %s186 = sadd.s32 %s185, 1
      %s187 = scalar_select %p184, %s185, %s186
      %p190 = pneg %p184
      %p191 = scmp.eq.s32.totalorder %s33, 1
      %p192 = por %p190, %p191
      %p193 = scmp.ne.s32.totalorder %s185, %s188
      %p194 = scmp.eq.s32.totalorder %s33, 0
      %p195 = por %p193, %p194
      %p196 = scmp.ne.s32.totalorder %s185, %s188
      %p197 = scmp.eq.s32.totalorder %s38, 1
      %p198 = por %p196, %p197
      %p199 = scmp.ne.s32.totalorder %s188, %s189
      %p200 = scmp.eq.s32.totalorder %s38, 0
      %p201 = por %p199, %p200
      %p202 = scmp.ne.s32.totalorder %s188, %s189
      %p203 = scmp.eq.s32.totalorder %s39, 1
      %p204 = por %p202, %p203
      %p206 = scmp.ne.s32.totalorder %s189, %s205
      %p207 = scmp.eq.s32.totalorder %s39, 0
      %p208 = por %p206, %p207
      %s209 = ssub.s32 %s41, %s48
      %p210 = scmp.eq.s32.totalorder %s209, 0
      %s212 = sadd.s32 %s211, 1
      %s213 = scalar_select %p210, %s211, %s212
      %p216 = pneg %p210
      %p217 = scmp.eq.s32.totalorder %s33, 1
      %p218 = por %p216, %p217
      %p219 = scmp.ne.s32.totalorder %s211, %s214
      %p220 = scmp.eq.s32.totalorder %s33, 0
      %p221 = por %p219, %p220
      %p222 = scmp.ne.s32.totalorder %s211, %s214
      %p223 = scmp.eq.s32.totalorder %s38, 1
      %p224 = por %p222, %p223
      %p225 = scmp.ne.s32.totalorder %s214, %s215
      %p226 = scmp.eq.s32.totalorder %s38, 0
      %p227 = por %p225, %p226
      %p228 = scmp.ne.s32.totalorder %s214, %s215
      %p229 = scmp.eq.s32.totalorder %s39, 1
      %p230 = por %p228, %p229
      %p232 = scmp.ne.s32.totalorder %s215, %s231
      %p233 = scmp.eq.s32.totalorder %s39, 0
      %p234 = por %p232, %p233
      %s235 = ssub.s32 %s41, %s48
      %p236 = scmp.eq.s32.totalorder %s235, 0
      %s238 = sadd.s32 %s237, 1
      %s239 = scalar_select %p236, %s237, %s238
      %p242 = pneg %p236
      %p243 = scmp.eq.s32.totalorder %s33, 1
      %p244 = por %p242, %p243
      %p245 = scmp.ne.s32.totalorder %s237, %s240
      %p246 = scmp.eq.s32.totalorder %s33, 0
      %p247 = por %p245, %p246
      %p248 = scmp.ne.s32.totalorder %s237, %s240
      %p249 = scmp.eq.s32.totalorder %s38, 1
      %p250 = por %p248, %p249
      %p251 = scmp.ne.s32.totalorder %s240, %s241
      %p252 = scmp.eq.s32.totalorder %s38, 0
      %p253 = por %p251, %p252
      %p254 = scmp.ne.s32.totalorder %s240, %s241
      %p255 = scmp.eq.s32.totalorder %s39, 1
      %p256 = por %p254, %p255
      %p258 = scmp.ne.s32.totalorder %s241, %s257
      %p259 = scmp.eq.s32.totalorder %s39, 0
      %p260 = por %p258, %p259
      %s261 = ssub.s32 %s41, %s48
      %p262 = scmp.eq.s32.totalorder %s261, 0
      %s264 = sadd.s32 %s263, 1
      %s265 = scalar_select %p262, %s263, %s264
      %p268 = pneg %p262
      %p269 = scmp.eq.s32.totalorder %s33, 1
      %p270 = por %p268, %p269
      %p271 = scmp.ne.s32.totalorder %s263, %s266
      %p272 = scmp.eq.s32.totalorder %s33, 0
      %p273 = por %p271, %p272
      %p274 = scmp.ne.s32.totalorder %s263, %s266
      %p275 = scmp.eq.s32.totalorder %s38, 1
      %p276 = por %p274, %p275
      %p277 = scmp.ne.s32.totalorder %s266, %s267
      %p278 = scmp.eq.s32.totalorder %s38, 0
      %p279 = por %p277, %p278
      %p280 = scmp.ne.s32.totalorder %s266, %s267
      %p281 = scmp.eq.s32.totalorder %s39, 1
      %p282 = por %p280, %p281
      %p284 = scmp.ne.s32.totalorder %s267, %s283
      %p285 = scmp.eq.s32.totalorder %s39, 0
      %p286 = por %p284, %p285
      %s287 = ssub.s32 %s41, %s48
      %p288 = scmp.eq.s32.totalorder %s287, 0
      %s290 = sadd.s32 %s289, 1
      %s291 = scalar_select %p288, %s289, %s290
      %p294 = pneg %p288
      %p295 = scmp.eq.s32.totalorder %s33, 1
      %p296 = por %p294, %p295
      %p297 = scmp.ne.s32.totalorder %s289, %s292
      %p298 = scmp.eq.s32.totalorder %s33, 0
      %p299 = por %p297, %p298
      %p300 = scmp.ne.s32.totalorder %s289, %s292
      %p301 = scmp.eq.s32.totalorder %s38, 1
      %p302 = por %p300, %p301
      %p303 = scmp.ne.s32.totalorder %s292, %s293
      %p304 = scmp.eq.s32.totalorder %s38, 0
      %p305 = por %p303, %p304
      %p306 = scmp.ne.s32.totalorder %s292, %s293
      %p307 = scmp.eq.s32.totalorder %s39, 1
      %p308 = por %p306, %p307
      %p310 = scmp.ne.s32.totalorder %s293, %s309
      %p311 = scmp.eq.s32.totalorder %s39, 0
      %p312 = por %p310, %p311
      %s313 = ssub.s32 %s41, %s48
      %p314 = scmp.eq.s32.totalorder %s313, 0
      %s316 = sadd.s32 %s315, 1
      %s317 = scalar_select %p314, %s315, %s316
      %p320 = pneg %p314
      %p321 = scmp.eq.s32.totalorder %s33, 1
      %p322 = por %p320, %p321
      %p323 = scmp.ne.s32.totalorder %s315, %s318
      %p324 = scmp.eq.s32.totalorder %s33, 0
      %p325 = por %p323, %p324
      %p326 = scmp.ne.s32.totalorder %s315, %s318
      %p327 = scmp.eq.s32.totalorder %s38, 1
      %p328 = por %p326, %p327
      %p329 = scmp.ne.s32.totalorder %s318, %s319
      %p330 = scmp.eq.s32.totalorder %s38, 0
      %p331 = por %p329, %p330
      %p332 = scmp.ne.s32.totalorder %s318, %s319
      %p333 = scmp.eq.s32.totalorder %s39, 1
      %p334 = por %p332, %p333
      %p336 = scmp.ne.s32.totalorder %s319, %s335
      %p337 = scmp.eq.s32.totalorder %s39, 0
      %p338 = por %p336, %p337
      %s339 = ssub.s32 %s40, %s52
      %p340 = scmp.eq.s32.totalorder %s339, 0
      %s342 = sadd.s32 %s341, 1
      %s343 = scalar_select %p340, %s341, %s342
      %p346 = pneg %p340
      %p347 = scmp.eq.s32.totalorder %s33, 1
      %p348 = por %p346, %p347
      %p349 = scmp.ne.s32.totalorder %s341, %s344
      %p350 = scmp.eq.s32.totalorder %s33, 0
      %p351 = por %p349, %p350
      %p352 = scmp.ne.s32.totalorder %s341, %s344
      %p353 = scmp.eq.s32.totalorder %s38, 1
      %p354 = por %p352, %p353
      %p355 = scmp.ne.s32.totalorder %s344, %s345
      %p356 = scmp.eq.s32.totalorder %s38, 0
      %p357 = por %p355, %p356
      %p358 = scmp.ne.s32.totalorder %s344, %s345
      %p359 = scmp.eq.s32.totalorder %s39, 1
      %p360 = por %p358, %p359
      %p362 = scmp.ne.s32.totalorder %s345, %s361
      %p363 = scmp.eq.s32.totalorder %s39, 0
      %p364 = por %p362, %p363
      %p365 = scmp.le.s32.totalorder 1, %s33
      %p366 = scmp.lt.s32.totalorder %s33, 3
      %p367 = pnand %p365, %p366
      %p368 = pneg %p367
      // Predicated region
      $region9: #{tpu_custom_call.1} parent=5 // pred_check
        _
      $region10: #{tpu_custom_call.1} parent=5 // pred_check_branch
        %370 = sbr.rel (%p367) target = $region12
      $region11: #{tpu_custom_call.1} parent=5 // pred_region
        %s371 = ssub.s32 %s33, 1
        // Predicated region
        $region13: #{tpu_custom_call.1} parent=11 // pred_check
          %p372 = pneg %p71
        $region14: #{tpu_custom_call.1} parent=11 // pred_check_branch
          %374 = sbr.rel (%p372) target = $region16
        $region15: #{tpu_custom_call.1} parent=11 // pred_region
          %s375 = smul.u32 2, %s42
          %s377 = ssub.s32 256, 256
          %378 = vsyncadd [#allocation6], %s377
          %s379 = smul.addr %s375, 128
          %s380 = scalar_lea.hbm %s1, %s379
          %s381 = sshll.u32 [#allocation5], 4
          %s382 = int_to_ptr.vmem [resolvable:$true] %s381
          %387 = dma.hbm_to_vmem [thread:$0]  %s380, 256, %s382, [#allocation6], 128, 128, 8
        $region16: #{tpu_custom_call.1} parent=11 // pred_fallthru
          _
      $region12: #{tpu_custom_call.1} parent=5 // pred_fallthru
        _
      %p388 = scmp.lt.s32.totalorder %s33, 2
      // Predicated region
      $region17: #{tpu_custom_call.1} parent=5 // pred_check
        %p389 = pneg %p388
      $region18: #{tpu_custom_call.1} parent=5 // pred_check_branch
        %391 = sbr.rel (%p389) target = $region20
      $region19: #{tpu_custom_call.1} parent=5 // pred_region
        // Predicated region
        $region21: #{tpu_custom_call.1} parent=19 // pred_check
          %p392 = pneg %p91
        $region22: #{tpu_custom_call.1} parent=19 // pred_check_branch
          %394 = sbr.rel (%p392) target = $region24
        $region23: #{tpu_custom_call.1} parent=19 // pred_region
          %s395 = sand.u32 %s33, 1
          %s396 = scalar_lea.sflag [#allocation9], %s395
          %s397 = sand.u32 %s81, 1
          %s398 = scalar_lea.vmem [#allocation8], %s397
          %s400 = ssub.s32 16, 16
          %401 = vsyncadd %s396, %s400
          %s402 = smul.addr %s41, 16
          %s403 = scalar_lea.hbm %s2, %s402
          %s405 = sshll.u32 %s398, 4
          %s406 = int_to_ptr.vmem [resolvable:$true] %s405
          %408 = dma.hbm_to_vmem [thread:$0]  %s403, 16, %s406, %s396
        $region24: #{tpu_custom_call.1} parent=19 // pred_fallthru
          _
        // Predicated region
        $region25: #{tpu_custom_call.1} parent=19 // pred_check
          %p409 = pneg %p117
        $region26: #{tpu_custom_call.1} parent=19 // pred_check_branch
          %411 = sbr.rel (%p409) target = $region28
        $region27: #{tpu_custom_call.1} parent=19 // pred_region
          %s412 = sand.u32 %s33, 1
          %s413 = scalar_lea.sflag [#allocation9], %s412
          %s414 = sand.u32 %s107, 1
          %s415 = scalar_lea.vmem [#allocation10], %s414
          %s417 = ssub.s32 16, 16
          %418 = vsyncadd %s413, %s417
          %s419 = smul.addr %s41, 16
          %s420 = scalar_lea.hbm %s3, %s419
          %s422 = sshll.u32 %s415, 4
          %s423 = int_to_ptr.vmem [resolvable:$true] %s422
          %425 = dma.hbm_to_vmem [thread:$0]  %s420, 16, %s423, %s413
        $region28: #{tpu_custom_call.1} parent=19 // pred_fallthru
          _
        // Predicated region
        $region29: #{tpu_custom_call.1} parent=19 // pred_check
          %p426 = pneg %p143
        $region30: #{tpu_custom_call.1} parent=19 // pred_check_branch
          %428 = sbr.rel (%p426) target = $region32
        $region31: #{tpu_custom_call.1} parent=19 // pred_region
          %s429 = sand.u32 %s33, 1
          %s430 = scalar_lea.sflag [#allocation12], %s429
          %s431 = sand.u32 %s133, 1
          %s432 = smul.addr %s431, 192
          %s433 = scalar_lea.vmem [#allocation11], %s432
          %s435 = ssub.s32 3072, 3072
          %436 = vsyncadd %s430, %s435
          %s437 = smul.addr %s41, 48
          %s438 = smul.addr %s437, 64
          %s439 = scalar_lea.hbm %s4, %s438
          %s440 = sshll.u32 %s433, 4
          %s441 = int_to_ptr.vmem [resolvable:$true] %s440
          %446 = dma.hbm_to_vmem [thread:$0]  %s439, 3072, %s441, %s430, 192, 192, 12
        $region32: #{tpu_custom_call.1} parent=19 // pred_fallthru
          _
        // Predicated region
        $region33: #{tpu_custom_call.1} parent=19 // pred_check
          %p447 = pneg %p169
        $region34: #{tpu_custom_call.1} parent=19 // pred_check_branch
          %449 = sbr.rel (%p447) target = $region36
        $region35: #{tpu_custom_call.1} parent=19 // pred_region
          %p450 = scmp.lt.s32.totalorder %s41, 1
          %s451 = scalar_select %p450, %s41, 1
          %s452 = smul.addr %s451, 3
          %s453 = scalar_lea.vmem %s5, %s452
        $region36: #{tpu_custom_call.1} parent=19 // pred_fallthru
          _
        // Predicated region
        $region37: #{tpu_custom_call.1} parent=19 // pred_check
          %p454 = pneg %p195
        $region38: #{tpu_custom_call.1} parent=19 // pred_check_branch
          %456 = sbr.rel (%p454) target = $region40
        $region39: #{tpu_custom_call.1} parent=19 // pred_region
          %s457 = sand.u32 %s33, 1
          %s458 = scalar_lea.sflag [#allocation12], %s457
          %s459 = sand.u32 %s185, 1
          %s460 = smul.addr %s459, 64
          %s461 = scalar_lea.vmem [#allocation13], %s460
          %s463 = ssub.s32 1024, 1024
          %464 = vsyncadd %s458, %s463
          %s465 = smul.addr %s41, 16
          %s466 = smul.addr %s465, 64
          %s467 = scalar_lea.hbm %s6, %s466
          %s468 = sshll.u32 %s461, 4
          %s469 = int_to_ptr.vmem [resolvable:$true] %s468
          %474 = dma.hbm_to_vmem [thread:$0]  %s467, 1024, %s469, %s458, 64, 64, 4
        $region40: #{tpu_custom_call.1} parent=19 // pred_fallthru
          _
        // Predicated region
        $region41: #{tpu_custom_call.1} parent=19 // pred_check
          %p475 = pneg %p221
        $region42: #{tpu_custom_call.1} parent=19 // pred_check_branch
          %477 = sbr.rel (%p475) target = $region44
        $region43: #{tpu_custom_call.1} parent=19 // pred_region
          %p478 = scmp.lt.s32.totalorder %s41, 1
          %s479 = scalar_select %p478, %s41, 1
          %s480 = scalar_lea.vmem %s7, %s479
        $region44: #{tpu_custom_call.1} parent=19 // pred_fallthru
          _
        // Predicated region
        $region45: #{tpu_custom_call.1} parent=19 // pred_check
          %p481 = pneg %p247
        $region46: #{tpu_custom_call.1} parent=19 // pred_check_branch
          %483 = sbr.rel (%p481) target = $region48
        $region47: #{tpu_custom_call.1} parent=19 // pred_region
          %s484 = sand.u32 %s33, 1
          %s485 = scalar_lea.sflag [#allocation15], %s484
          %s486 = sand.u32 %s237, 1
          %s487 = smul.addr %s486, 128
          %s488 = scalar_lea.vmem [#allocation14], %s487
          %s490 = ssub.s32 2048, 2048
          %491 = vsyncadd %s485, %s490
          %s492 = smul.addr %s41, 32
          %s493 = smul.addr %s492, 64
          %s494 = scalar_lea.hbm %s8, %s493
          %s495 = sshll.u32 %s488, 4
          %s496 = int_to_ptr.vmem [resolvable:$true] %s495
          %501 = dma.hbm_to_vmem [thread:$0]  %s494, 2048, %s496, %s485, 128, 128, 8
        $region48: #{tpu_custom_call.1} parent=19 // pred_fallthru
          _
        // Predicated region
        $region49: #{tpu_custom_call.1} parent=19 // pred_check
          %p502 = pneg %p273
        $region50: #{tpu_custom_call.1} parent=19 // pred_check_branch
          %504 = sbr.rel (%p502) target = $region52
        $region51: #{tpu_custom_call.1} parent=19 // pred_region
          %p505 = scmp.lt.s32.totalorder %s41, 1
          %s506 = scalar_select %p505, %s41, 1
          %s507 = smul.addr %s506, 2
          %s508 = scalar_lea.vmem %s9, %s507
        $region52: #{tpu_custom_call.1} parent=19 // pred_fallthru
          _
        // Predicated region
        $region53: #{tpu_custom_call.1} parent=19 // pred_check
          %p509 = pneg %p299
        $region54: #{tpu_custom_call.1} parent=19 // pred_check_branch
          %511 = sbr.rel (%p509) target = $region56
        $region55: #{tpu_custom_call.1} parent=19 // pred_region
          %s512 = sand.u32 %s33, 1
          %s513 = scalar_lea.sflag [#allocation15], %s512
          %s514 = sand.u32 %s289, 1
          %s515 = smul.addr %s514, 128
          %s516 = scalar_lea.vmem [#allocation16], %s515
          %s518 = ssub.s32 2048, 2048
          %519 = vsyncadd %s513, %s518
          %s520 = smul.addr %s41, 32
          %s521 = smul.addr %s520, 64
          %s522 = scalar_lea.hbm %s10, %s521
          %s523 = sshll.u32 %s516, 4
          %s524 = int_to_ptr.vmem [resolvable:$true] %s523
          %529 = dma.hbm_to_vmem [thread:$0]  %s522, 2048, %s524, %s513, 64, 64, 4
        $region56: #{tpu_custom_call.1} parent=19 // pred_fallthru
          _
        // Predicated region
        $region57: #{tpu_custom_call.1} parent=19 // pred_check
          %p530 = pneg %p325
        $region58: #{tpu_custom_call.1} parent=19 // pred_check_branch
          %532 = sbr.rel (%p530) target = $region60
        $region59: #{tpu_custom_call.1} parent=19 // pred_region
          %p533 = scmp.lt.s32.totalorder %s41, 1
          %s534 = scalar_select %p533, %s41, 1
          %s535 = scalar_lea.vmem %s11, %s534
        $region60: #{tpu_custom_call.1} parent=19 // pred_fallthru
          _
      $region20: #{tpu_custom_call.1} parent=5 // pred_fallthru
        _
      %p536 = scmp.le.s32.totalorder 1, %s33
      %p537 = scmp.lt.s32.totalorder %s33, 3
      %p538 = pnand %p536, %p537
      %p539 = pneg %p538
      // Predicated region
      $region61: #{tpu_custom_call.1} parent=5 // pred_check
        _
      $region62: #{tpu_custom_call.1} parent=5 // pred_check_branch
        %541 = sbr.rel (%p538) target = $region64
      $region63: #{tpu_custom_call.1} parent=5 // pred_region
        %s542 = ssub.s32 %s33, 1
        // Predicated region
        $region65: #{tpu_custom_call.1} parent=63 // pred_check
          %p543 = pneg %p71
        $region66: #{tpu_custom_call.1} parent=63 // pred_check_branch
          %545 = sbr.rel (%p543) target = $region68
        $region67: #{tpu_custom_call.1} parent=63 // pred_region
          %546 = dma.done [#allocation6], 256
        $region68: #{tpu_custom_call.1} parent=63 // pred_fallthru
          _
        %s547 = sand.u32 %s38, 1
        %s548 = scalar_lea.sflag [#allocation9], %s547
        %s549 = sand.u32 %s84, 1
        %s550 = scalar_lea.vmem [#allocation8], %s549
        // Predicated region
        $region69: #{tpu_custom_call.1} parent=63 // pred_check
          %p551 = pneg %p97
        $region70: #{tpu_custom_call.1} parent=63 // pred_check_branch
          %553 = sbr.rel (%p551) target = $region72
        $region71: #{tpu_custom_call.1} parent=63 // pred_region
          %554 = dma.done %s548, 16
        $region72: #{tpu_custom_call.1} parent=63 // pred_fallthru
          _
        %s555 = sand.u32 %s38, 1
        %s556 = scalar_lea.sflag [#allocation9], %s555
        %s557 = sand.u32 %s110, 1
        %s558 = scalar_lea.vmem [#allocation10], %s557
        // Predicated region
        $region73: #{tpu_custom_call.1} parent=63 // pred_check
          %p559 = pneg %p123
        $region74: #{tpu_custom_call.1} parent=63 // pred_check_branch
          %561 = sbr.rel (%p559) target = $region76
        $region75: #{tpu_custom_call.1} parent=63 // pred_region
          %562 = dma.done %s556, 16
        $region76: #{tpu_custom_call.1} parent=63 // pred_fallthru
          _
        %s563 = sand.u32 %s38, 1
        %s564 = scalar_lea.sflag [#allocation12], %s563
        %s565 = sand.u32 %s136, 1
        %s566 = smul.addr %s565, 192
        %s567 = scalar_lea.vmem [#allocation11], %s566
        // Predicated region
        $region77: #{tpu_custom_call.1} parent=63 // pred_check
          %p568 = pneg %p149
        $region78: #{tpu_custom_call.1} parent=63 // pred_check_branch
          %570 = sbr.rel (%p568) target = $region80
        $region79: #{tpu_custom_call.1} parent=63 // pred_region
          %571 = dma.done %s564, 3072
        $region80: #{tpu_custom_call.1} parent=63 // pred_fallthru
          _
        %s572 = sand.u32 %s38, 1
        %s573 = scalar_lea.sflag [#allocation12], %s572
        %s574 = sand.u32 %s188, 1
        %s575 = smul.addr %s574, 64
        %s576 = scalar_lea.vmem [#allocation13], %s575
        // Predicated region
        $region81: #{tpu_custom_call.1} parent=63 // pred_check
          %p577 = pneg %p201
        $region82: #{tpu_custom_call.1} parent=63 // pred_check_branch
          %579 = sbr.rel (%p577) target = $region84
        $region83: #{tpu_custom_call.1} parent=63 // pred_region
          %580 = dma.done %s573, 1024
        $region84: #{tpu_custom_call.1} parent=63 // pred_fallthru
          _
        %s581 = sand.u32 %s38, 1
        %s582 = scalar_lea.sflag [#allocation15], %s581
        %s583 = sand.u32 %s240, 1
        %s584 = smul.addr %s583, 128
        %s585 = scalar_lea.vmem [#allocation14], %s584
        // Predicated region
        $region85: #{tpu_custom_call.1} parent=63 // pred_check
          %p586 = pneg %p253
        $region86: #{tpu_custom_call.1} parent=63 // pred_check_branch
          %588 = sbr.rel (%p586) target = $region88
        $region87: #{tpu_custom_call.1} parent=63 // pred_region
          %589 = dma.done %s582, 2048
        $region88: #{tpu_custom_call.1} parent=63 // pred_fallthru
          _
        %s590 = sand.u32 %s38, 1
        %s591 = scalar_lea.sflag [#allocation15], %s590
        %s592 = sand.u32 %s292, 1
        %s593 = smul.addr %s592, 128
        %s594 = scalar_lea.vmem [#allocation16], %s593
        // Predicated region
        $region89: #{tpu_custom_call.1} parent=63 // pred_check
          %p595 = pneg %p305
        $region90: #{tpu_custom_call.1} parent=63 // pred_check_branch
          %597 = sbr.rel (%p595) target = $region92
        $region91: #{tpu_custom_call.1} parent=63 // pred_region
          %598 = dma.done %s591, 2048
        $region92: #{tpu_custom_call.1} parent=63 // pred_fallthru
          _
        %p599 = pneg %p71
        %p600 = pneg %p68
        %s601 = sand.u32 %s38, 1
        %s602 = scalar_lea.sflag [#allocation9], %s601
        %s603 = sand.u32 %s84, 1
        %s604 = scalar_lea.vmem [#allocation8], %s603
        %p605 = pneg %p97
        %p606 = pneg %p94
        %s607 = sand.u32 %s38, 1
        %s608 = scalar_lea.sflag [#allocation9], %s607
        %s609 = sand.u32 %s110, 1
        %s610 = scalar_lea.vmem [#allocation10], %s609
        %p611 = pneg %p123
        %p612 = pneg %p120
        %s613 = sand.u32 %s38, 1
        %s614 = scalar_lea.sflag [#allocation12], %s613
        %s615 = sand.u32 %s136, 1
        %s616 = smul.addr %s615, 192
        %s617 = scalar_lea.vmem [#allocation11], %s616
        %p618 = pneg %p149
        %p619 = pneg %p146
        %p620 = scmp.lt.s32.totalorder %s43, 1
        %s621 = scalar_select %p620, %s43, 1
        %s622 = smul.addr %s621, 3
        %s623 = scalar_lea.vmem %s5, %s622
        %p624 = pneg %p175
        %p625 = pneg %p172
        %s626 = sand.u32 %s38, 1
        %s627 = scalar_lea.sflag [#allocation12], %s626
        %s628 = sand.u32 %s188, 1
        %s629 = smul.addr %s628, 64
        %s630 = scalar_lea.vmem [#allocation13], %s629
        %p631 = pneg %p201
        %p632 = pneg %p198
        %p633 = scmp.lt.s32.totalorder %s43, 1
        %s634 = scalar_select %p633, %s43, 1
        %s635 = scalar_lea.vmem %s7, %s634
        %p636 = pneg %p227
        %p637 = pneg %p224
        %s638 = sand.u32 %s38, 1
        %s639 = scalar_lea.sflag [#allocation15], %s638
        %s640 = sand.u32 %s240, 1
        %s641 = smul.addr %s640, 128
        %s642 = scalar_lea.vmem [#allocation14], %s641
        %p643 = pneg %p253
        %p644 = pneg %p250
        %p645 = scmp.lt.s32.totalorder %s43, 1
        %s646 = scalar_select %p645, %s43, 1
        %s647 = smul.addr %s646, 2
        %s648 = scalar_lea.vmem %s9, %s647
        %p649 = pneg %p279
        %p650 = pneg %p276
        %s651 = sand.u32 %s38, 1
        %s652 = scalar_lea.sflag [#allocation15], %s651
        %s653 = sand.u32 %s292, 1
        %s654 = smul.addr %s653, 128
        %s655 = scalar_lea.vmem [#allocation16], %s654
        %p656 = pneg %p305
        %p657 = pneg %p302
        %p658 = scmp.lt.s32.totalorder %s43, 1
        %s659 = scalar_select %p658, %s43, 1
        %s660 = scalar_lea.vmem %s11, %s659
        %p661 = pneg %p331
        %p662 = pneg %p328
        %p663 = pneg %p357
        %p664 = pneg %p354
        %s665 = smul.u32 2, %s42
        %p666 = scmp.lt.s32.totalorder %s43, 1
        %s667 = scalar_select %p666, %s43, 1
        %s668 = smul.addr %s667, 3
        %s669 = scalar_lea.vmem %s5, %s668
        %p670 = scmp.lt.s32.totalorder %s43, 1
        %s671 = scalar_select %p670, %s43, 1
        %s672 = scalar_lea.vmem %s7, %s671
        %p673 = scmp.lt.s32.totalorder %s43, 1
        %s674 = scalar_select %p673, %s43, 1
        %s675 = smul.addr %s674, 2
        %s676 = scalar_lea.vmem %s9, %s675
        %p677 = scmp.lt.s32.totalorder %s43, 1
        %s678 = scalar_select %p677, %s43, 1
        %s679 = scalar_lea.vmem %s11, %s678
        %s680 = smul.u32 2, %s42
        %p682 = scmp.eq.s32.totalorder %s43, 0
        // Predicated region
        $region93: #{tpu_custom_call.1} parent=63 // pred_check
          %p683 = pneg %p682
        $region94: #{tpu_custom_call.1} parent=63 // pred_check_branch
          %685 = sbr.rel (%p683) target = $region96
        $region95: #{tpu_custom_call.1} parent=63 // pred_region
          %v686 = vld [vmem:[#allocation5] sm:$0xff]
          %v687 = vld [vmem:[#allocation5 + $0x8] sm:$0xff]
          %688 = vst [vmem:[#allocation17] sm:$0xff] %v686
          %689 = vst [vmem:[#allocation17 + $0x8] sm:$0xff] %v687
          %v690 = vlaneseq
          %v691 = vand.u32 %v690, 127
          %s692 = smul.u32 %s42, 2
          %s693 = sld [smem:[#allocation4 + %s692]]
          %v694 = vstv %s693
          %vm695 = vcmp.ge.s32.totalorder %v691, %v694
          %v696 = vsel %vm695, -1e+30, 0.0
          %vm697 = vcmask 57344
          %698 = vst.msk [vmem:[#allocation2] sm:$0x1] %vm697, %v696
          %s699 = sadd.s32 %s692, 1
          %s700 = sld [smem:[#allocation4 + %s699]]
          %v701 = vstv %s700
          %vm702 = vcmp.ge.s32.totalorder %v691, %v701
          %v703 = vsel %vm702, -1e+30, 0.0
          %704 = vst.msk [vmem:[#allocation2 + $0x1] sm:$0x1] %vm697, %v703
        $region96: #{tpu_custom_call.1} parent=63 // pred_fallthru
          _
        %v705 = vld [vmem:[#allocation17] sm:$0xff]
        %v706 = vld [vmem:[#allocation17 + $0x8] sm:$0xff]
        %707 = vadd.xlane.f32.xlu0 %v705
        %v708 = vpop.xlane.xlu0 %707
        %709 = vadd.xlane.f32.xlu0 %v706
        %v710 = vpop.xlane.xlu0 %709
        %v711 = vrcp.pop 128.0
        %v712 = vmul.f32 %v708, %v711
        %v713 = vmul.f32 %v710, %v711
        %v714 = vsub.f32 %v705, %v712
        %v715 = vsub.f32 %v706, %v713
        %v716 = vmul.f32 %v714, %v714
        %v717 = vmul.f32 %v715, %v715
        %718 = vadd.xlane.f32.xlu0 %v716
        %v719 = vpop.xlane.xlu0 %718
        %720 = vadd.xlane.f32.xlu0 %v717
        %v721 = vpop.xlane.xlu0 %720
        %v722 = vmul.f32 %v719, %v711
        %v723 = vmul.f32 %v721, %v711
        %v724 = vadd.f32 %v722, 1e-05
        %v725 = vadd.f32 %v723, 1e-05
        %v726 = vrsqrt.pop %v724
        %v727 = vrsqrt.pop %v725
        %v728 = vmul.f32 %v714, %v726
        %v729 = vmul.f32 %v715, %v727
        %v730 = vld [vmem:[%s550] sm:$0x1]
        %v732 = vlaneseq
        %v733 = vshrl.u32 %v732, 7
        %v734 = vsub.s32 0, %v733
        %v735 = vrot.slane %v730, %v734
        %v737 = vmul.f32 %v728, %v735
        %v738 = vmul.f32 %v729, %v735
        %v739 = vld [vmem:[%s558] sm:$0x1]
        %v741 = vlaneseq
        %v742 = vshrl.u32 %v741, 7
        %v743 = vsub.s32 0, %v742
        %v744 = vrot.slane %v739, %v743
        %v746 = vadd.f32 %v737, %v744
        %v747 = vadd.f32 %v738, %v744
        %v748 = vpack.c.bf16 %v747, %v746
        %v749 = vld [vmem:[%s567] sm:$0xff]
        %v750 = vld [vmem:[%s567 + $0x8] sm:$0xf]
        %v751 = vld [vmem:[%s567 + $0xc] sm:$0xff]
        %v752 = vld [vmem:[%s567 + $0x14] sm:$0xf]
        %v753 = vld [vmem:[%s567 + $0x18] sm:$0xff]
        %v754 = vld [vmem:[%s567 + $0x20] sm:$0xf]
        %v755 = vld [vmem:[%s567 + $0x24] sm:$0xff]
        %v756 = vld [vmem:[%s567 + $0x2c] sm:$0xf]
        %v757 = vld [vmem:[%s567 + $0x30] sm:$0xff]
        %v758 = vld [vmem:[%s567 + $0x38] sm:$0xf]
        %v759 = vld [vmem:[%s567 + $0x3c] sm:$0xff]
        %v760 = vld [vmem:[%s567 + $0x44] sm:$0xf]
        %v761 = vld [vmem:[%s567 + $0x48] sm:$0xff]
        %v762 = vld [vmem:[%s567 + $0x50] sm:$0xf]
        %v763 = vld [vmem:[%s567 + $0x54] sm:$0xff]
        %v764 = vld [vmem:[%s567 + $0x5c] sm:$0xf]
        %v765 = vld [vmem:[%s567 + $0x60] sm:$0xff]
        %v766 = vld [vmem:[%s567 + $0x68] sm:$0xf]
        %v767 = vld [vmem:[%s567 + $0x6c] sm:$0xff]
        %v768 = vld [vmem:[%s567 + $0x74] sm:$0xf]
        %v769 = vld [vmem:[%s567 + $0x78] sm:$0xff]
        %v770 = vld [vmem:[%s567 + $0x80] sm:$0xf]
        %v771 = vld [vmem:[%s567 + $0x84] sm:$0xff]
        %v772 = vld [vmem:[%s567 + $0x8c] sm:$0xf]
        %v773 = vld [vmem:[%s567 + $0x90] sm:$0xff]
        %v774 = vld [vmem:[%s567 + $0x98] sm:$0xf]
        %v775 = vld [vmem:[%s567 + $0x9c] sm:$0xff]
        %v776 = vld [vmem:[%s567 + $0xa4] sm:$0xf]
        %v777 = vld [vmem:[%s567 + $0xa8] sm:$0xff]
        %v778 = vld [vmem:[%s567 + $0xb0] sm:$0xf]
        %v779 = vld [vmem:[%s567 + $0xb4] sm:$0xff]
        %v780 = vld [vmem:[%s567 + $0xbc] sm:$0xf]
        %v781 = vld [vmem:[%s669] sm:$0x7]
        %v783 = vlaneseq
        %v784 = vshrl.u32 %v783, 7
        %v785 = vsub.s32 0, %v784
        %v786 = vrot.slane %v781, %v785
        %v787 = vlaneseq
        %v788 = vshrl.u32 %v787, 7
        %v789 = vsub.s32 1, %v788
        %v790 = vrot.slane %v781, %v789
        %v791 = vlaneseq
        %v792 = vshrl.u32 %v791, 7
        %v793 = vsub.s32 2, %v792
        %v794 = vrot.slane %v781, %v793
        %v830 = vunpack.c.l.b16 %v749
        %v831 = vunpack.c.h.b16 %v749
        %v832 = vunpack.c.l.b16 %v750
        %v833 = vunpack.c.l.b16 %v751
        %v834 = vunpack.c.h.b16 %v751
        %v835 = vunpack.c.l.b16 %v752
        %v836 = vunpack.c.l.b16 %v753
        %v837 = vunpack.c.h.b16 %v753
        %v838 = vunpack.c.l.b16 %v754
        %v839 = vunpack.c.l.b16 %v755
        %v840 = vunpack.c.h.b16 %v755
        %v841 = vunpack.c.l.b16 %v756
        %v842 = vunpack.c.l.b16 %v757
        %v843 = vunpack.c.h.b16 %v757
        %v844 = vunpack.c.l.b16 %v758
        %v845 = vunpack.c.l.b16 %v759
        %v846 = vunpack.c.h.b16 %v759
        %v847 = vunpack.c.l.b16 %v760
        %v848 = vunpack.c.l.b16 %v761
        %v849 = vunpack.c.h.b16 %v761
        %v850 = vunpack.c.l.b16 %v762
        %v851 = vunpack.c.l.b16 %v763
        %v852 = vunpack.c.h.b16 %v763
        %v853 = vunpack.c.l.b16 %v764
        %v854 = vunpack.c.l.b16 %v765
        %v855 = vunpack.c.h.b16 %v765
        %v856 = vunpack.c.l.b16 %v766
        %v857 = vunpack.c.l.b16 %v767
        %v858 = vunpack.c.h.b16 %v767
        %v859 = vunpack.c.l.b16 %v768
        %v860 = vunpack.c.l.b16 %v769
        %v861 = vunpack.c.h.b16 %v769
        %v862 = vunpack.c.l.b16 %v770
        %v863 = vunpack.c.l.b16 %v771
        %v864 = vunpack.c.h.b16 %v771
        %v865 = vunpack.c.l.b16 %v772
        %v866 = vunpack.c.l.b16 %v773
        %v867 = vunpack.c.h.b16 %v773
        %v868 = vunpack.c.l.b16 %v774
        %v869 = vunpack.c.l.b16 %v775
        %v870 = vunpack.c.h.b16 %v775
        %v871 = vunpack.c.l.b16 %v776
        %v872 = vunpack.c.l.b16 %v777
        %v873 = vunpack.c.h.b16 %v777
        %v874 = vunpack.c.l.b16 %v778
        %v875 = vunpack.c.l.b16 %v779
        %v876 = vunpack.c.h.b16 %v779
        %v877 = vunpack.c.l.b16 %v780
        %v878 = vpack.c.b16 %v833, %v830
        %v879 = vpack.c.b16 %v834, %v831
        %v880 = vpack.c.b16 %v835, %v832
        %v881 = vpack.c.b16 %v839, %v836
        %v882 = vpack.c.b16 %v840, %v837
        %v883 = vpack.c.b16 %v841, %v838
        %v884 = vpack.c.b16 %v845, %v842
        %v885 = vpack.c.b16 %v846, %v843
        %v886 = vpack.c.b16 %v847, %v844
        %v887 = vpack.c.b16 %v851, %v848
        %v888 = vpack.c.b16 %v852, %v849
        %v889 = vpack.c.b16 %v853, %v850
        %v890 = vpack.c.b16 %v857, %v854
        %v891 = vpack.c.b16 %v858, %v855
        %v892 = vpack.c.b16 %v859, %v856
        %v893 = vpack.c.b16 %v863, %v860
        %v894 = vpack.c.b16 %v864, %v861
        %v895 = vpack.c.b16 %v865, %v862
        %v896 = vpack.c.b16 %v869, %v866
        %v897 = vpack.c.b16 %v870, %v867
        %v898 = vpack.c.b16 %v871, %v868
        %v899 = vpack.c.b16 %v875, %v872
        %v900 = vpack.c.b16 %v876, %v873
        %v901 = vpack.c.b16 %v877, %v874
        %926 = vmatprep.subr.bf16.mxu0 %v900
        %927 = vmatpush1.bf16.msra.mxu0 %v899
        %928 = vmatprep.subr.bf16.mxu0 %v897
        %929 = vmatpush1.bf16.msra.mxu0 %v896
        %930 = vmatprep.subr.bf16.mxu0 %v894
        %931 = vmatpush1.bf16.msra.mxu0 %v893
        %932 = vmatprep.subr.bf16.mxu0 %v891
        %933 = vmatpush1.bf16.msra.mxu0 %v890
        %934 = vmatprep.subr.bf16.mxu0 %v888
        %935 = vmatpush1.bf16.msra.mxu0 %v887
        %936 = vmatprep.subr.bf16.mxu0 %v885
        %937 = vmatpush1.bf16.msra.mxu0 %v884
        %938 = vmatprep.subr.bf16.mxu0 %v882
        %939 = vmatpush1.bf16.msra.mxu0 %v881
        %940 = vmatprep.subr.bf16.mxu0 %v879
        %941 = vmatpush1.bf16.msra.mxu0 %v878
        %942 = vmatprep.subr.bf16.mxu0 0
        %943 = vmatpush2.bf16.msra.mxu0 0
        %944 = vmatprep.subr.bf16.mxu0 0
        %945 = vmatpush2.bf16.msra.mxu0 0
        %946 = vmatprep.subr.bf16.mxu0 0
        %947 = vmatpush2.bf16.msra.mxu0 0
        %948 = vmatprep.subr.bf16.mxu0 0
        %949 = vmatpush2.bf16.msra.mxu0 0
        %950 = vmatprep.subr.bf16.mxu0 0
        %951 = vmatpush2.bf16.msra.mxu0 0
        %952 = vmatprep.subr.bf16.mxu0 0
        %953 = vmatpush2.bf16.msra.mxu0 0
        %954 = vmatprep.subr.bf16.mxu0 0
        %955 = vmatpush2.bf16.msra.mxu0 0
        %956 = vmatprep.subr.bf16.mxu0 0
        %957 = vmatpush2.bf16.msra.mxu0 0
        %958 = vmatprep.mubr.bf16.mxu0 0
        %959 = vmatmul.mubr.bf16.gmra.mxu0 %v748
        %v960 = vpop.f32.mrf.mxu0
        %v961 = vadd.f32 %v786, %v960
        %v962 = vpop.f32.mrf.mxu0
        %v963 = vadd.f32 %v790, %v962
        %v964 = vpop.f32.mrf.mxu0
        %v965 = vadd.f32 %v786, %v964
        %v966 = vpop.f32.mrf.mxu0
        %v967 = vadd.f32 %v790, %v966
        %968 = vdwg.mxu0
        %969 = vmatprep.subr.bf16.mxu0 0
        %970 = vmatpush1.bf16.msra.mxu0 %v901
        %971 = vmatprep.subr.bf16.mxu0 0
        %972 = vmatpush1.bf16.msra.mxu0 %v898
        %973 = vmatprep.subr.bf16.mxu0 0
        %974 = vmatpush1.bf16.msra.mxu0 %v895
        %975 = vmatprep.subr.bf16.mxu0 0
        %976 = vmatpush1.bf16.msra.mxu0 %v892
        %977 = vmatprep.subr.bf16.mxu0 0
        %978 = vmatpush1.bf16.msra.mxu0 %v889
        %979 = vmatprep.subr.bf16.mxu0 0
        %980 = vmatpush1.bf16.msra.mxu0 %v886
        %981 = vmatprep.subr.bf16.mxu0 0
        %982 = vmatpush1.bf16.msra.mxu0 %v883
        %983 = vmatprep.subr.bf16.mxu0 0
        %984 = vmatpush1.bf16.msra.mxu0 %v880
        %985 = vmatprep.subr.bf16.mxu0 0
        %986 = vmatpush2.bf16.msra.mxu0 0
        %987 = vmatprep.subr.bf16.mxu0 0
        %988 = vmatpush2.bf16.msra.mxu0 0
        %989 = vmatprep.subr.bf16.mxu0 0
        %990 = vmatpush2.bf16.msra.mxu0 0
        %991 = vmatprep.subr.bf16.mxu0 0
        %992 = vmatpush2.bf16.msra.mxu0 0
        %993 = vmatprep.subr.bf16.mxu0 0
        %994 = vmatpush2.bf16.msra.mxu0 0
        %995 = vmatprep.subr.bf16.mxu0 0
        %996 = vmatpush2.bf16.msra.mxu0 0
        %997 = vmatprep.subr.bf16.mxu0 0
        %998 = vmatpush2.bf16.msra.mxu0 0
        %999 = vmatprep.subr.bf16.mxu0 0
        %1000 = vmatpush2.bf16.msra.mxu0 0
        %1001 = vmatprep.mubr.bf16.mxu0 0
        %1002 = vmatmul.mubr.bf16.gmra.mxu0 %v748
        %v1003 = vpop.f32.mrf.mxu0
        %v1004 = vadd.f32 %v794, %v1003
        %v1005 = vpop.f32.mrf.mxu0
        %v1006 = vpop.f32.mrf.mxu0
        %v1007 = vadd.f32 %v794, %v1006
        %v1008 = vpop.f32.mrf.mxu0
        %1009 = vdwg.mxu0
        %v1010 = vpack.c.bf16 %v965, %v961
        %v1011 = vpack.c.bf16 %v967, %v963
        %v1012 = vpack.c.bf16 %v1007, %v1004
        %1014 = vrot.lane.b32.xlu0 %v1010, 96
        %v1015 = vpop.permute.xlu0 %1014
        %1016 = vrot.lane.b32.xlu0 %v1010, 64
        %v1017 = vpop.permute.xlu0 %1016
        %1018 = vrot.lane.b32.xlu0 %v1010, 32
        %v1019 = vpop.permute.xlu0 %1018
        %1021 = vrot.lane.b32.xlu0 %v1011, 96
        %v1022 = vpop.permute.xlu0 %1021
        %1023 = vrot.lane.b32.xlu0 %v1011, 64
        %v1024 = vpop.permute.xlu0 %1023
        %1025 = vrot.lane.b32.xlu0 %v1011, 32
        %v1026 = vpop.permute.xlu0 %1025
        %1028 = vrot.lane.b32.xlu0 %v1012, 96
        %v1029 = vpop.permute.xlu0 %1028
        %1030 = vrot.lane.b32.xlu0 %v1012, 64
        %v1031 = vpop.permute.xlu0 %1030
        %1032 = vrot.lane.b32.xlu0 %v1012, 32
        %v1033 = vpop.permute.xlu0 %1032
        %v1034 = vld [vmem:[#allocation2] sm:$0x3]
        %v1035 = vlaneseq
        %v1036 = vshrl.u32 %v1035, 7
        %v1037 = vsub.s32 0, %v1036
        %v1038 = vrot.slane %v1034, %v1037
        %vm1039 = vcmask 261120
        %v1041 = vsel %vm1039, %v1010, 0
        %v1044 = vsel %vm1039, %v1011, 0
        %1046 = vmatprep.subr.bf16.mxu0 0
        %1047 = vmatpush1.bf16.xpose.msra.mxu0 0
        %1048 = vmatprep.subr.bf16.mxu0 0
        %1049 = vmatpush1.bf16.xpose.msra.mxu0 0
        %1050 = vmatprep.subr.bf16.mxu0 0
        %1051 = vmatpush1.bf16.xpose.msra.mxu0 0
        %1052 = vmatprep.subr.bf16.mxu0 0
        %1053 = vmatpush1.bf16.xpose.msra.mxu0 0
        %1054 = vmatprep.subr.bf16.mxu0 0
        %1055 = vmatpush1.bf16.xpose.msra.mxu0 0
        %1056 = vmatprep.subr.bf16.mxu0 0
        %1057 = vmatpush1.bf16.xpose.msra.mxu0 0
        %1058 = vmatprep.subr.bf16.mxu0 0
        %1059 = vmatpush1.bf16.xpose.msra.mxu0 0
        %1060 = vmatprep.subr.bf16.mxu0 0
        %1061 = vmatpush1.bf16.xpose.msra.mxu0 %v1044
        %1062 = vmatprep.subr.bf16.mxu0 0
        %1063 = vmatpush2.bf16.xpose.msra.mxu0 0
        %1064 = vmatprep.subr.bf16.mxu0 0
        %1065 = vmatpush2.bf16.xpose.msra.mxu0 0
        %1066 = vmatprep.subr.bf16.mxu0 0
        %1067 = vmatpush2.bf16.xpose.msra.mxu0 0
        %1068 = vmatprep.subr.bf16.mxu0 0
        %1069 = vmatpush2.bf16.xpose.msra.mxu0 0
        %1070 = vmatprep.subr.bf16.mxu0 0
        %1071 = vmatpush2.bf16.xpose.msra.mxu0 0
        %1072 = vmatprep.subr.bf16.mxu0 0
        %1073 = vmatpush2.bf16.xpose.msra.mxu0 0
        %1074 = vmatprep.subr.bf16.mxu0 0
        %1075 = vmatpush2.bf16.xpose.msra.mxu0 0
        %1076 = vmatprep.subr.bf16.mxu0 0
        %1077 = vmatpush2.bf16.xpose.msra.mxu0 0
        %1078 = vmatprep.mubr.bf16.mxu0 0
        %1079 = vmatmul.mubr.bf16.gmra.mxu0 %v1041
        %v1080 = vpop.f32.mrf.mxu0
        %v1081 = vadd.f32 %v1038, %v1080
        %v1082 = vpop.f32.mrf.mxu0
        %v1083 = vpop.f32.mrf.mxu0
        %v1084 = vpop.f32.mrf.mxu0
        %1085 = vdwg.mxu0
        %v1087 = vsel %vm1039, %v1015, 0
        %v1090 = vsel %vm1039, %v1022, 0
        %1092 = vmatprep.subr.bf16.mxu0 0
        %1093 = vmatpush1.bf16.xpose.msra.mxu0 0
        %1094 = vmatprep.subr.bf16.mxu0 0
        %1095 = vmatpush1.bf16.xpose.msra.mxu0 0
        %1096 = vmatprep.subr.bf16.mxu0 0
        %1097 = vmatpush1.bf16.xpose.msra.mxu0 0
        %1098 = vmatprep.subr.bf16.mxu0 0
        %1099 = vmatpush1.bf16.xpose.msra.mxu0 0
        %1100 = vmatprep.subr.bf16.mxu0 0
        %1101 = vmatpush1.bf16.xpose.msra.mxu0 0
        %1102 = vmatprep.subr.bf16.mxu0 0
        %1103 = vmatpush1.bf16.xpose.msra.mxu0 0
        %1104 = vmatprep.subr.bf16.mxu0 0
        %1105 = vmatpush1.bf16.xpose.msra.mxu0 0
        %1106 = vmatprep.subr.bf16.mxu0 0
        %1107 = vmatpush1.bf16.xpose.msra.mxu0 %v1090
        %1108 = vmatprep.subr.bf16.mxu0 0
        %1109 = vmatpush2.bf16.xpose.msra.mxu0 0
        %1110 = vmatprep.subr.bf16.mxu0 0
        %1111 = vmatpush2.bf16.xpose.msra.mxu0 0
        %1112 = vmatprep.subr.bf16.mxu0 0
        %1113 = vmatpush2.bf16.xpose.msra.mxu0 0
        %1114 = vmatprep.subr.bf16.mxu0 0
        %1115 = vmatpush2.bf16.xpose.msra.mxu0 0
        %1116 = vmatprep.subr.bf16.mxu0 0
        %1117 = vmatpush2.bf16.xpose.msra.mxu0 0
        %1118 = vmatprep.subr.bf16.mxu0 0
        %1119 = vmatpush2.bf16.xpose.msra.mxu0 0
        %1120 = vmatprep.subr.bf16.mxu0 0
        %1121 = vmatpush2.bf16.xpose.msra.mxu0 0
        %1122 = vmatprep.subr.bf16.mxu0 0
        %1123 = vmatpush2.bf16.xpose.msra.mxu0 0
        %1124 = vmatprep.mubr.bf16.mxu0 0
        %1125 = vmatmul.mubr.bf16.gmra.mxu0 %v1087
        %v1126 = vpop.f32.mrf.mxu0
        %v1127 = vadd.f32 %v1038, %v1126
        %v1128 = vpop.f32.mrf.mxu0
        %v1129 = vpop.f32.mrf.mxu0
        %v1130 = vpop.f32.mrf.mxu0
        %1131 = vdwg.mxu0
        %v1133 = vsel %vm1039, %v1017, 0
        %v1136 = vsel %vm1039, %v1024, 0
        %1138 = vmatprep.subr.bf16.mxu0 0
        %1139 = vmatpush1.bf16.xpose.msra.mxu0 0
        %1140 = vmatprep.subr.bf16.mxu0 0
        %1141 = vmatpush1.bf16.xpose.msra.mxu0 0
        %1142 = vmatprep.subr.bf16.mxu0 0
        %1143 = vmatpush1.bf16.xpose.msra.mxu0 0
        %1144 = vmatprep.subr.bf16.mxu0 0
        %1145 = vmatpush1.bf16.xpose.msra.mxu0 0
        %1146 = vmatprep.subr.bf16.mxu0 0
        %1147 = vmatpush1.bf16.xpose.msra.mxu0 0
        %1148 = vmatprep.subr.bf16.mxu0 0
        %1149 = vmatpush1.bf16.xpose.msra.mxu0 0
        %1150 = vmatprep.subr.bf16.mxu0 0
        %1151 = vmatpush1.bf16.xpose.msra.mxu0 0
        %1152 = vmatprep.subr.bf16.mxu0 0
        %1153 = vmatpush1.bf16.xpose.msra.mxu0 %v1136
        %1154 = vmatprep.subr.bf16.mxu0 0
        %1155 = vmatpush2.bf16.xpose.msra.mxu0 0
        %1156 = vmatprep.subr.bf16.mxu0 0
        %1157 = vmatpush2.bf16.xpose.msra.mxu0 0
        %1158 = vmatprep.subr.bf16.mxu0 0
        %1159 = vmatpush2.bf16.xpose.msra.mxu0 0
        %1160 = vmatprep.subr.bf16.mxu0 0
        %1161 = vmatpush2.bf16.xpose.msra.mxu0 0
        %1162 = vmatprep.subr.bf16.mxu0 0
        %1163 = vmatpush2.bf16.xpose.msra.mxu0 0
        %1164 = vmatprep.subr.bf16.mxu0 0
        %1165 = vmatpush2.bf16.xpose.msra.mxu0 0
        %1166 = vmatprep.subr.bf16.mxu0 0
        %1167 = vmatpush2.bf16.xpose.msra.mxu0 0
        %1168 = vmatprep.subr.bf16.mxu0 0
        %1169 = vmatpush2.bf16.xpose.msra.mxu0 0
        %1170 = vmatprep.mubr.bf16.mxu0 0
        %1171 = vmatmul.mubr.bf16.gmra.mxu0 %v1133
        %v1172 = vpop.f32.mrf.mxu0
        %v1173 = vadd.f32 %v1038, %v1172
        %v1174 = vpop.f32.mrf.mxu0
        %v1175 = vpop.f32.mrf.mxu0
        %v1176 = vpop.f32.mrf.mxu0
        %1177 = vdwg.mxu0
        %v1179 = vsel %vm1039, %v1019, 0
        %v1182 = vsel %vm1039, %v1026, 0
        %1184 = vmatprep.subr.bf16.mxu0 0
        %1185 = vmatpush1.bf16.xpose.msra.mxu0 0
        %1186 = vmatprep.subr.bf16.mxu0 0
        %1187 = vmatpush1.bf16.xpose.msra.mxu0 0
        %1188 = vmatprep.subr.bf16.mxu0 0
        %1189 = vmatpush1.bf16.xpose.msra.mxu0 0
        %1190 = vmatprep.subr.bf16.mxu0 0
        %1191 = vmatpush1.bf16.xpose.msra.mxu0 0
        %1192 = vmatprep.subr.bf16.mxu0 0
        %1193 = vmatpush1.bf16.xpose.msra.mxu0 0
        %1194 = vmatprep.subr.bf16.mxu0 0
        %1195 = vmatpush1.bf16.xpose.msra.mxu0 0
        %1196 = vmatprep.subr.bf16.mxu0 0
        %1197 = vmatpush1.bf16.xpose.msra.mxu0 0
        %1198 = vmatprep.subr.bf16.mxu0 0
        %1199 = vmatpush1.bf16.xpose.msra.mxu0 %v1182
        %1200 = vmatprep.subr.bf16.mxu0 0
        %1201 = vmatpush2.bf16.xpose.msra.mxu0 0
        %1202 = vmatprep.subr.bf16.mxu0 0
        %1203 = vmatpush2.bf16.xpose.msra.mxu0 0
        %1204 = vmatprep.subr.bf16.mxu0 0
        %1205 = vmatpush2.bf16.xpose.msra.mxu0 0
        %1206 = vmatprep.subr.bf16.mxu0 0
        %1207 = vmatpush2.bf16.xpose.msra.mxu0 0
        %1208 = vmatprep.subr.bf16.mxu0 0
        %1209 = vmatpush2.bf16.xpose.msra.mxu0 0
        %1210 = vmatprep.subr.bf16.mxu0 0
        %1211 = vmatpush2.bf16.xpose.msra.mxu0 0
        %1212 = vmatprep.subr.bf16.mxu0 0
        %1213 = vmatpush2.bf16.xpose.msra.mxu0 0
        %1214 = vmatprep.subr.bf16.mxu0 0
        %1215 = vmatpush2.bf16.xpose.msra.mxu0 0
        %1216 = vmatprep.mubr.bf16.mxu0 0
        %1217 = vmatmul.mubr.bf16.gmra.mxu0 %v1179
        %v1218 = vpop.f32.mrf.mxu0
        %v1219 = vadd.f32 %v1038, %v1218
        %v1220 = vpop.f32.mrf.mxu0
        %v1221 = vpop.f32.mrf.mxu0
        %v1222 = vpop.f32.mrf.mxu0
        %1223 = vdwg.mxu0
        %vm1224 = vcmask 64512
        %v1225 = vsel %vm1224, %v1081, -inf
        %1226 = vmax.xlane.f32.xlu0 %v1225
        %v1227 = vpop.xlane.xlu0 %1226
        %v1228 = vsel %vm1224, %v1127, -inf
        %1229 = vmax.xlane.f32.xlu0 %v1228
        %v1230 = vpop.xlane.xlu0 %1229
        %v1231 = vsel %vm1224, %v1173, -inf
        %1232 = vmax.xlane.f32.xlu0 %v1231
        %v1233 = vpop.xlane.xlu0 %1232
        %v1234 = vsel %vm1224, %v1219, -inf
        %1235 = vmax.xlane.f32.xlu0 %v1234
        %v1236 = vpop.xlane.xlu0 %1235
        %v1237 = vsub.f32 %v1081, %v1227
        %v1238 = vsub.f32 %v1127, %v1230
        %v1239 = vsub.f32 %v1173, %v1233
        %v1240 = vsub.f32 %v1219, %v1236
        %v1241 = vmul.f32 %v1237, 1.442695
        %v1242 = vpow.pop %v1241
        %v1243 = vmul.f32 %v1238, 1.442695
        %v1244 = vpow.pop %v1243
        %v1245 = vmul.f32 %v1239, 1.442695
        %v1246 = vpow.pop %v1245
        %v1247 = vmul.f32 %v1240, 1.442695
        %v1248 = vpow.pop %v1247
        %v1249 = vsel %vm1224, %v1242, 0.0
        %1250 = vadd.xlane.f32.xlu0 %v1249
        %v1251 = vpop.xlane.xlu0 %1250
        %v1252 = vsel %vm1224, %v1244, 0.0
        %1253 = vadd.xlane.f32.xlu0 %v1252
        %v1254 = vpop.xlane.xlu0 %1253
        %v1255 = vsel %vm1224, %v1246, 0.0
        %1256 = vadd.xlane.f32.xlu0 %v1255
        %v1257 = vpop.xlane.xlu0 %1256
        %v1258 = vsel %vm1224, %v1248, 0.0
        %1259 = vadd.xlane.f32.xlu0 %v1258
        %v1260 = vpop.xlane.xlu0 %1259
        %v1261 = vrcp.pop %v1251
        %v1262 = vrcp.pop %v1254
        %v1263 = vrcp.pop %v1257
        %v1264 = vrcp.pop %v1260
        %v1265 = vmul.f32 %v1242, %v1261
        %v1266 = vmul.f32 %v1244, %v1262
        %v1267 = vmul.f32 %v1246, %v1263
        %v1268 = vmul.f32 %v1248, %v1264
        %v1269 = vpack.c.bf16 %v1265, %v1265
        %v1270 = vpack.c.bf16 %v1266, %v1266
        %v1271 = vpack.c.bf16 %v1267, %v1267
        %v1272 = vpack.c.bf16 %v1268, %v1268
        %v1274 = vsel %vm1224, %v1269, 0
        %vm1276 = vcmask 1043456
        %v1278 = vsel %vm1276, %v1012, 0
        %1280 = vmatprep.subr.bf16.mxu0 0
        %1281 = vmatpush1.bf16.msra.mxu0 0
        %1282 = vmatprep.subr.bf16.mxu0 0
        %1283 = vmatpush1.bf16.msra.mxu0 0
        %1284 = vmatprep.subr.bf16.mxu0 0
        %1285 = vmatpush1.bf16.msra.mxu0 0
        %1286 = vmatprep.subr.bf16.mxu0 0
        %1287 = vmatpush1.bf16.msra.mxu0 0
        %1288 = vmatprep.subr.bf16.mxu0 0
        %1289 = vmatpush1.bf16.msra.mxu0 0
        %1290 = vmatprep.subr.bf16.mxu0 0
        %1291 = vmatpush1.bf16.msra.mxu0 0
        %1292 = vmatprep.subr.bf16.mxu0 0
        %1293 = vmatpush1.bf16.msra.mxu0 0
        %1294 = vmatprep.subr.bf16.mxu0 0
        %1295 = vmatpush1.bf16.msra.mxu0 %v1278
        %1296 = vmatprep.subr.bf16.mxu0 0
        %1297 = vmatpush2.bf16.msra.mxu0 0
        %1298 = vmatprep.subr.bf16.mxu0 0
        %1299 = vmatpush2.bf16.msra.mxu0 0
        %1300 = vmatprep.subr.bf16.mxu0 0
        %1301 = vmatpush2.bf16.msra.mxu0 0
        %1302 = vmatprep.subr.bf16.mxu0 0
        %1303 = vmatpush2.bf16.msra.mxu0 0
        %1304 = vmatprep.subr.bf16.mxu0 0
        %1305 = vmatpush2.bf16.msra.mxu0 0
        %1306 = vmatprep.subr.bf16.mxu0 0
        %1307 = vmatpush2.bf16.msra.mxu0 0
        %1308 = vmatprep.subr.bf16.mxu0 0
        %1309 = vmatpush2.bf16.msra.mxu0 0
        %1310 = vmatprep.subr.bf16.mxu0 0
        %1311 = vmatpush2.bf16.msra.mxu0 0
        %1312 = vmatprep.mubr.bf16.mxu0 0
        %1313 = vmatmul.mubr.bf16.gmra.mxu0 %v1274
        %v1314 = vpop.f32.mrf.mxu0
        %v1315 = vadd.f32 0.0, %v1314
        %v1316 = vpop.f32.mrf.mxu0
        %v1317 = vpop.f32.mrf.mxu0
        %v1318 = vpop.f32.mrf.mxu0
        %1319 = vdwg.mxu0
        %v1321 = vsel %vm1224, %v1270, 0
        %v1324 = vsel %vm1276, %v1029, 0
        %1326 = vmatprep.subr.bf16.mxu0 0
        %1327 = vmatpush1.bf16.msra.mxu0 0
        %1328 = vmatprep.subr.bf16.mxu0 0
        %1329 = vmatpush1.bf16.msra.mxu0 0
        %1330 = vmatprep.subr.bf16.mxu0 0
        %1331 = vmatpush1.bf16.msra.mxu0 0
        %1332 = vmatprep.subr.bf16.mxu0 0
        %1333 = vmatpush1.bf16.msra.mxu0 0
        %1334 = vmatprep.subr.bf16.mxu0 0
        %1335 = vmatpush1.bf16.msra.mxu0 0
        %1336 = vmatprep.subr.bf16.mxu0 0
        %1337 = vmatpush1.bf16.msra.mxu0 0
        %1338 = vmatprep.subr.bf16.mxu0 0
        %1339 = vmatpush1.bf16.msra.mxu0 0
        %1340 = vmatprep.subr.bf16.mxu0 0
        %1341 = vmatpush1.bf16.msra.mxu0 %v1324
        %1342 = vmatprep.subr.bf16.mxu0 0
        %1343 = vmatpush2.bf16.msra.mxu0 0
        %1344 = vmatprep.subr.bf16.mxu0 0
        %1345 = vmatpush2.bf16.msra.mxu0 0
        %1346 = vmatprep.subr.bf16.mxu0 0
        %1347 = vmatpush2.bf16.msra.mxu0 0
        %1348 = vmatprep.subr.bf16.mxu0 0
        %1349 = vmatpush2.bf16.msra.mxu0 0
        %1350 = vmatprep.subr.bf16.mxu0 0
        %1351 = vmatpush2.bf16.msra.mxu0 0
        %1352 = vmatprep.subr.bf16.mxu0 0
        %1353 = vmatpush2.bf16.msra.mxu0 0
        %1354 = vmatprep.subr.bf16.mxu0 0
        %1355 = vmatpush2.bf16.msra.mxu0 0
        %1356 = vmatprep.subr.bf16.mxu0 0
        %1357 = vmatpush2.bf16.msra.mxu0 0
        %1358 = vmatprep.mubr.bf16.mxu0 0
        %1359 = vmatmul.mubr.bf16.gmra.mxu0 %v1321
        %v1360 = vpop.f32.mrf.mxu0
        %v1361 = vadd.f32 0.0, %v1360
        %v1362 = vpop.f32.mrf.mxu0
        %v1363 = vpop.f32.mrf.mxu0
        %v1364 = vpop.f32.mrf.mxu0
        %1365 = vdwg.mxu0
        %v1367 = vsel %vm1224, %v1271, 0
        %v1370 = vsel %vm1276, %v1031, 0
        %1372 = vmatprep.subr.bf16.mxu0 0
        %1373 = vmatpush1.bf16.msra.mxu0 0
        %1374 = vmatprep.subr.bf16.mxu0 0
        %1375 = vmatpush1.bf16.msra.mxu0 0
        %1376 = vmatprep.subr.bf16.mxu0 0
        %1377 = vmatpush1.bf16.msra.mxu0 0
        %1378 = vmatprep.subr.bf16.mxu0 0
        %1379 = vmatpush1.bf16.msra.mxu0 0
        %1380 = vmatprep.subr.bf16.mxu0 0
        %1381 = vmatpush1.bf16.msra.mxu0 0
        %1382 = vmatprep.subr.bf16.mxu0 0
        %1383 = vmatpush1.bf16.msra.mxu0 0
        %1384 = vmatprep.subr.bf16.mxu0 0
        %1385 = vmatpush1.bf16.msra.mxu0 0
        %1386 = vmatprep.subr.bf16.mxu0 0
        %1387 = vmatpush1.bf16.msra.mxu0 %v1370
        %1388 = vmatprep.subr.bf16.mxu0 0
        %1389 = vmatpush2.bf16.msra.mxu0 0
        %1390 = vmatprep.subr.bf16.mxu0 0
        %1391 = vmatpush2.bf16.msra.mxu0 0
        %1392 = vmatprep.subr.bf16.mxu0 0
        %1393 = vmatpush2.bf16.msra.mxu0 0
        %1394 = vmatprep.subr.bf16.mxu0 0
        %1395 = vmatpush2.bf16.msra.mxu0 0
        %1396 = vmatprep.subr.bf16.mxu0 0
        %1397 = vmatpush2.bf16.msra.mxu0 0
        %1398 = vmatprep.subr.bf16.mxu0 0
        %1399 = vmatpush2.bf16.msra.mxu0 0
        %1400 = vmatprep.subr.bf16.mxu0 0
        %1401 = vmatpush2.bf16.msra.mxu0 0
        %1402 = vmatprep.subr.bf16.mxu0 0
        %1403 = vmatpush2.bf16.msra.mxu0 0
        %1404 = vmatprep.mubr.bf16.mxu0 0
        %1405 = vmatmul.mubr.bf16.gmra.mxu0 %v1367
        %v1406 = vpop.f32.mrf.mxu0
        %v1407 = vadd.f32 0.0, %v1406
        %v1408 = vpop.f32.mrf.mxu0
        %v1409 = vpop.f32.mrf.mxu0
        %v1410 = vpop.f32.mrf.mxu0
        %1411 = vdwg.mxu0
        %v1413 = vsel %vm1224, %v1272, 0
        %v1416 = vsel %vm1276, %v1033, 0
        %1418 = vmatprep.subr.bf16.mxu0 0
        %1419 = vmatpush1.bf16.msra.mxu0 0
        %1420 = vmatprep.subr.bf16.mxu0 0
        %1421 = vmatpush1.bf16.msra.mxu0 0
        %1422 = vmatprep.subr.bf16.mxu0 0
        %1423 = vmatpush1.bf16.msra.mxu0 0
        %1424 = vmatprep.subr.bf16.mxu0 0
        %1425 = vmatpush1.bf16.msra.mxu0 0
        %1426 = vmatprep.subr.bf16.mxu0 0
        %1427 = vmatpush1.bf16.msra.mxu0 0
        %1428 = vmatprep.subr.bf16.mxu0 0
        %1429 = vmatpush1.bf16.msra.mxu0 0
        %1430 = vmatprep.subr.bf16.mxu0 0
        %1431 = vmatpush1.bf16.msra.mxu0 0
        %1432 = vmatprep.subr.bf16.mxu0 0
        %1433 = vmatpush1.bf16.msra.mxu0 %v1416
        %1434 = vmatprep.subr.bf16.mxu0 0
        %1435 = vmatpush2.bf16.msra.mxu0 0
        %1436 = vmatprep.subr.bf16.mxu0 0
        %1437 = vmatpush2.bf16.msra.mxu0 0
        %1438 = vmatprep.subr.bf16.mxu0 0
        %1439 = vmatpush2.bf16.msra.mxu0 0
        %1440 = vmatprep.subr.bf16.mxu0 0
        %1441 = vmatpush2.bf16.msra.mxu0 0
        %1442 = vmatprep.subr.bf16.mxu0 0
        %1443 = vmatpush2.bf16.msra.mxu0 0
        %1444 = vmatprep.subr.bf16.mxu0 0
        %1445 = vmatpush2.bf16.msra.mxu0 0
        %1446 = vmatprep.subr.bf16.mxu0 0
        %1447 = vmatpush2.bf16.msra.mxu0 0
        %1448 = vmatprep.subr.bf16.mxu0 0
        %1449 = vmatpush2.bf16.msra.mxu0 0
        %1450 = vmatprep.mubr.bf16.mxu0 0
        %1451 = vmatmul.mubr.bf16.gmra.mxu0 %v1413
        %v1452 = vpop.f32.mrf.mxu0
        %v1453 = vadd.f32 0.0, %v1452
        %v1454 = vpop.f32.mrf.mxu0
        %v1455 = vpop.f32.mrf.mxu0
        %v1456 = vpop.f32.mrf.mxu0
        %1457 = vdwg.mxu0
        %1459 = vrot.lane.b32.xlu0 %v1361, 32
        %v1460 = vpop.permute.xlu0 %1459
        %1463 = vrot.lane.b32.xlu0 %v1407, 64
        %v1464 = vpop.permute.xlu0 %1463
        %1467 = vrot.lane.b32.xlu0 %v1453, 96
        %v1468 = vpop.permute.xlu0 %1467
        %v1470 = vsel %vm1039, %v1315, %v1460
        %vm1471 = vcmask 523264
        %v1472 = vsel %vm1471, %v1470, %v1464
        %vm1473 = vcmask 785408
        %v1474 = vsel %vm1473, %v1472, %v1468
        %v1475 = vlaneseq
        %v1476 = vshrl.u32 %v1475, 7
        %v1477 = vsub.s32 1, %v1476
        %v1478 = vrot.slane %v1034, %v1477
        %v1479 = vrot.slane %v1010, 4
        %v1480 = vrot.slane %v1011, 4
        %v1482 = vsel %vm1039, %v1479, 0
        %v1485 = vsel %vm1039, %v1480, 0
        %1487 = vmatprep.subr.bf16.mxu0 0
        %1488 = vmatpush1.bf16.xpose.msra.mxu0 0
        %1489 = vmatprep.subr.bf16.mxu0 0
        %1490 = vmatpush1.bf16.xpose.msra.mxu0 0
        %1491 = vmatprep.subr.bf16.mxu0 0
        %1492 = vmatpush1.bf16.xpose.msra.mxu0 0
        %1493 = vmatprep.subr.bf16.mxu0 0
        %1494 = vmatpush1.bf16.xpose.msra.mxu0 0
        %1495 = vmatprep.subr.bf16.mxu0 0
        %1496 = vmatpush1.bf16.xpose.msra.mxu0 0
        %1497 = vmatprep.subr.bf16.mxu0 0
        %1498 = vmatpush1.bf16.xpose.msra.mxu0 0
        %1499 = vmatprep.subr.bf16.mxu0 0
        %1500 = vmatpush1.bf16.xpose.msra.mxu0 0
        %1501 = vmatprep.subr.bf16.mxu0 0
        %1502 = vmatpush1.bf16.xpose.msra.mxu0 %v1485
        %1503 = vmatprep.subr.bf16.mxu0 0
        %1504 = vmatpush2.bf16.xpose.msra.mxu0 0
        %1505 = vmatprep.subr.bf16.mxu0 0
        %1506 = vmatpush2.bf16.xpose.msra.mxu0 0
        %1507 = vmatprep.subr.bf16.mxu0 0
        %1508 = vmatpush2.bf16.xpose.msra.mxu0 0
        %1509 = vmatprep.subr.bf16.mxu0 0
        %1510 = vmatpush2.bf16.xpose.msra.mxu0 0
        %1511 = vmatprep.subr.bf16.mxu0 0
        %1512 = vmatpush2.bf16.xpose.msra.mxu0 0
        %1513 = vmatprep.subr.bf16.mxu0 0
        %1514 = vmatpush2.bf16.xpose.msra.mxu0 0
        %1515 = vmatprep.subr.bf16.mxu0 0
        %1516 = vmatpush2.bf16.xpose.msra.mxu0 0
        %1517 = vmatprep.subr.bf16.mxu0 0
        %1518 = vmatpush2.bf16.xpose.msra.mxu0 0
        %1519 = vmatprep.mubr.bf16.mxu0 0
        %1520 = vmatmul.mubr.bf16.gmra.mxu0 %v1482
        %v1521 = vpop.f32.mrf.mxu0
        %v1522 = vadd.f32 %v1478, %v1521
        %v1523 = vpop.f32.mrf.mxu0
        %v1524 = vpop.f32.mrf.mxu0
        %v1525 = vpop.f32.mrf.mxu0
        %1526 = vdwg.mxu0
        %v1527 = vrot.slane %v1015, 4
        %v1528 = vrot.slane %v1022, 4
        %v1530 = vsel %vm1039, %v1527, 0
        %v1533 = vsel %vm1039, %v1528, 0
        %1535 = vmatprep.subr.bf16.mxu0 0
        %1536 = vmatpush1.bf16.xpose.msra.mxu0 0
        %1537 = vmatprep.subr.bf16.mxu0 0
        %1538 = vmatpush1.bf16.xpose.msra.mxu0 0
        %1539 = vmatprep.subr.bf16.mxu0 0
        %1540 = vmatpush1.bf16.xpose.msra.mxu0 0
        %1541 = vmatprep.subr.bf16.mxu0 0
        %1542 = vmatpush1.bf16.xpose.msra.mxu0 0
        %1543 = vmatprep.subr.bf16.mxu0 0
        %1544 = vmatpush1.bf16.xpose.msra.mxu0 0
        %1545 = vmatprep.subr.bf16.mxu0 0
        %1546 = vmatpush1.bf16.xpose.msra.mxu0 0
        %1547 = vmatprep.subr.bf16.mxu0 0
        %1548 = vmatpush1.bf16.xpose.msra.mxu0 0
        %1549 = vmatprep.subr.bf16.mxu0 0
        %1550 = vmatpush1.bf16.xpose.msra.mxu0 %v1533
        %1551 = vmatprep.subr.bf16.mxu0 0
        %1552 = vmatpush2.bf16.xpose.msra.mxu0 0
        %1553 = vmatprep.subr.bf16.mxu0 0
        %1554 = vmatpush2.bf16.xpose.msra.mxu0 0
        %1555 = vmatprep.subr.bf16.mxu0 0
        %1556 = vmatpush2.bf16.xpose.msra.mxu0 0
        %1557 = vmatprep.subr.bf16.mxu0 0
        %1558 = vmatpush2.bf16.xpose.msra.mxu0 0
        %1559 = vmatprep.subr.bf16.mxu0 0
        %1560 = vmatpush2.bf16.xpose.msra.mxu0 0
        %1561 = vmatprep.subr.bf16.mxu0 0
        %1562 = vmatpush2.bf16.xpose.msra.mxu0 0
        %1563 = vmatprep.subr.bf16.mxu0 0
        %1564 = vmatpush2.bf16.xpose.msra.mxu0 0
        %1565 = vmatprep.subr.bf16.mxu0 0
        %1566 = vmatpush2.bf16.xpose.msra.mxu0 0
        %1567 = vmatprep.mubr.bf16.mxu0 0
        %1568 = vmatmul.mubr.bf16.gmra.mxu0 %v1530
        %v1569 = vpop.f32.mrf.mxu0
        %v1570 = vadd.f32 %v1478, %v1569
        %v1571 = vpop.f32.mrf.mxu0
        %v1572 = vpop.f32.mrf.mxu0
        %v1573 = vpop.f32.mrf.mxu0
        %1574 = vdwg.mxu0
        %v1575 = vrot.slane %v1017, 4
        %v1576 = vrot.slane %v1024, 4
        %v1578 = vsel %vm1039, %v1575, 0
        %v1581 = vsel %vm1039, %v1576, 0
        %1583 = vmatprep.subr.bf16.mxu0 0
        %1584 = vmatpush1.bf16.xpose.msra.mxu0 0
        %1585 = vmatprep.subr.bf16.mxu0 0
        %1586 = vmatpush1.bf16.xpose.msra.mxu0 0
        %1587 = vmatprep.subr.bf16.mxu0 0
        %1588 = vmatpush1.bf16.xpose.msra.mxu0 0
        %1589 = vmatprep.subr.bf16.mxu0 0
        %1590 = vmatpush1.bf16.xpose.msra.mxu0 0
        %1591 = vmatprep.subr.bf16.mxu0 0
        %1592 = vmatpush1.bf16.xpose.msra.mxu0 0
        %1593 = vmatprep.subr.bf16.mxu0 0
        %1594 = vmatpush1.bf16.xpose.msra.mxu0 0
        %1595 = vmatprep.subr.bf16.mxu0 0
        %1596 = vmatpush1.bf16.xpose.msra.mxu0 0
        %1597 = vmatprep.subr.bf16.mxu0 0
        %1598 = vmatpush1.bf16.xpose.msra.mxu0 %v1581
        %1599 = vmatprep.subr.bf16.mxu0 0
        %1600 = vmatpush2.bf16.xpose.msra.mxu0 0
        %1601 = vmatprep.subr.bf16.mxu0 0
        %1602 = vmatpush2.bf16.xpose.msra.mxu0 0
        %1603 = vmatprep.subr.bf16.mxu0 0
        %1604 = vmatpush2.bf16.xpose.msra.mxu0 0
        %1605 = vmatprep.subr.bf16.mxu0 0
        %1606 = vmatpush2.bf16.xpose.msra.mxu0 0
        %1607 = vmatprep.subr.bf16.mxu0 0
        %1608 = vmatpush2.bf16.xpose.msra.mxu0 0
        %1609 = vmatprep.subr.bf16.mxu0 0
        %1610 = vmatpush2.bf16.xpose.msra.mxu0 0
        %1611 = vmatprep.subr.bf16.mxu0 0
        %1612 = vmatpush2.bf16.xpose.msra.mxu0 0
        %1613 = vmatprep.subr.bf16.mxu0 0
        %1614 = vmatpush2.bf16.xpose.msra.mxu0 0
        %1615 = vmatprep.mubr.bf16.mxu0 0
        %1616 = vmatmul.mubr.bf16.gmra.mxu0 %v1578
        %v1617 = vpop.f32.mrf.mxu0
        %v1618 = vadd.f32 %v1478, %v1617
        %v1619 = vpop.f32.mrf.mxu0
        %v1620 = vpop.f32.mrf.mxu0
        %v1621 = vpop.f32.mrf.mxu0
        %1622 = vdwg.mxu0
        %v1623 = vrot.slane %v1019, 4
        %v1624 = vrot.slane %v1026, 4
        %v1626 = vsel %vm1039, %v1623, 0
        %v1629 = vsel %vm1039, %v1624, 0
        %1631 = vmatprep.subr.bf16.mxu0 0
        %1632 = vmatpush1.bf16.xpose.msra.mxu0 0
        %1633 = vmatprep.subr.bf16.mxu0 0
        %1634 = vmatpush1.bf16.xpose.msra.mxu0 0
        %1635 = vmatprep.subr.bf16.mxu0 0
        %1636 = vmatpush1.bf16.xpose.msra.mxu0 0
        %1637 = vmatprep.subr.bf16.mxu0 0
        %1638 = vmatpush1.bf16.xpose.msra.mxu0 0
        %1639 = vmatprep.subr.bf16.mxu0 0
        %1640 = vmatpush1.bf16.xpose.msra.mxu0 0
        %1641 = vmatprep.subr.bf16.mxu0 0
        %1642 = vmatpush1.bf16.xpose.msra.mxu0 0
        %1643 = vmatprep.subr.bf16.mxu0 0
        %1644 = vmatpush1.bf16.xpose.msra.mxu0 0
        %1645 = vmatprep.subr.bf16.mxu0 0
        %1646 = vmatpush1.bf16.xpose.msra.mxu0 %v1629
        %1647 = vmatprep.subr.bf16.mxu0 0
        %1648 = vmatpush2.bf16.xpose.msra.mxu0 0
        %1649 = vmatprep.subr.bf16.mxu0 0
        %1650 = vmatpush2.bf16.xpose.msra.mxu0 0
        %1651 = vmatprep.subr.bf16.mxu0 0
        %1652 = vmatpush2.bf16.xpose.msra.mxu0 0
        %1653 = vmatprep.subr.bf16.mxu0 0
        %1654 = vmatpush2.bf16.xpose.msra.mxu0 0
        %1655 = vmatprep.subr.bf16.mxu0 0
        %1656 = vmatpush2.bf16.xpose.msra.mxu0 0
        %1657 = vmatprep.subr.bf16.mxu0 0
        %1658 = vmatpush2.bf16.xpose.msra.mxu0 0
        %1659 = vmatprep.subr.bf16.mxu0 0
        %1660 = vmatpush2.bf16.xpose.msra.mxu0 0
        %1661 = vmatprep.subr.bf16.mxu0 0
        %1662 = vmatpush2.bf16.xpose.msra.mxu0 0
        %1663 = vmatprep.mubr.bf16.mxu0 0
        %1664 = vmatmul.mubr.bf16.gmra.mxu0 %v1626
        %v1665 = vpop.f32.mrf.mxu0
        %v1666 = vadd.f32 %v1478, %v1665
        %v1667 = vpop.f32.mrf.mxu0
        %v1668 = vpop.f32.mrf.mxu0
        %v1669 = vpop.f32.mrf.mxu0
        %1670 = vdwg.mxu0
        %v1671 = vsel %vm1224, %v1522, -inf
        %1672 = vmax.xlane.f32.xlu0 %v1671
        %v1673 = vpop.xlane.xlu0 %1672
        %v1674 = vsel %vm1224, %v1570, -inf
        %1675 = vmax.xlane.f32.xlu0 %v1674
        %v1676 = vpop.xlane.xlu0 %1675
        %v1677 = vsel %vm1224, %v1618, -inf
        %1678 = vmax.xlane.f32.xlu0 %v1677
        %v1679 = vpop.xlane.xlu0 %1678
        %v1680 = vsel %vm1224, %v1666, -inf
        %1681 = vmax.xlane.f32.xlu0 %v1680
        %v1682 = vpop.xlane.xlu0 %1681
        %v1683 = vsub.f32 %v1522, %v1673
        %v1684 = vsub.f32 %v1570, %v1676
        %v1685 = vsub.f32 %v1618, %v1679
        %v1686 = vsub.f32 %v1666, %v1682
        %v1687 = vmul.f32 %v1683, 1.442695
        %v1688 = vpow.pop %v1687
        %v1689 = vmul.f32 %v1684, 1.442695
        %v1690 = vpow.pop %v1689
        %v1691 = vmul.f32 %v1685, 1.442695
        %v1692 = vpow.pop %v1691
        %v1693 = vmul.f32 %v1686, 1.442695
        %v1694 = vpow.pop %v1693
        %v1695 = vsel %vm1224, %v1688, 0.0
        %1696 = vadd.xlane.f32.xlu0 %v1695
        %v1697 = vpop.xlane.xlu0 %1696
        %v1698 = vsel %vm1224, %v1690, 0.0
        %1699 = vadd.xlane.f32.xlu0 %v1698
        %v1700 = vpop.xlane.xlu0 %1699
        %v1701 = vsel %vm1224, %v1692, 0.0
        %1702 = vadd.xlane.f32.xlu0 %v1701
        %v1703 = vpop.xlane.xlu0 %1702
        %v1704 = vsel %vm1224, %v1694, 0.0
        %1705 = vadd.xlane.f32.xlu0 %v1704
        %v1706 = vpop.xlane.xlu0 %1705
        %v1707 = vrcp.pop %v1697
        %v1708 = vrcp.pop %v1700
        %v1709 = vrcp.pop %v1703
        %v1710 = vrcp.pop %v1706
        %v1711 = vmul.f32 %v1688, %v1707
        %v1712 = vmul.f32 %v1690, %v1708
        %v1713 = vmul.f32 %v1692, %v1709
        %v1714 = vmul.f32 %v1694, %v1710
        %v1715 = vpack.c.bf16 %v1711, %v1711
        %v1716 = vpack.c.bf16 %v1712, %v1712
        %v1717 = vpack.c.bf16 %v1713, %v1713
        %v1718 = vpack.c.bf16 %v1714, %v1714
        %v1719 = vrot.slane %v1012, 4
        %v1721 = vsel %vm1224, %v1715, 0
        %v1724 = vsel %vm1276, %v1719, 0
        %1726 = vmatprep.subr.bf16.mxu0 0
        %1727 = vmatpush1.bf16.msra.mxu0 0
        %1728 = vmatprep.subr.bf16.mxu0 0
        %1729 = vmatpush1.bf16.msra.mxu0 0
        %1730 = vmatprep.subr.bf16.mxu0 0
        %1731 = vmatpush1.bf16.msra.mxu0 0
        %1732 = vmatprep.subr.bf16.mxu0 0
        %1733 = vmatpush1.bf16.msra.mxu0 0
        %1734 = vmatprep.subr.bf16.mxu0 0
        %1735 = vmatpush1.bf16.msra.mxu0 0
        %1736 = vmatprep.subr.bf16.mxu0 0
        %1737 = vmatpush1.bf16.msra.mxu0 0
        %1738 = vmatprep.subr.bf16.mxu0 0
        %1739 = vmatpush1.bf16.msra.mxu0 0
        %1740 = vmatprep.subr.bf16.mxu0 0
        %1741 = vmatpush1.bf16.msra.mxu0 %v1724
        %1742 = vmatprep.subr.bf16.mxu0 0
        %1743 = vmatpush2.bf16.msra.mxu0 0
        %1744 = vmatprep.subr.bf16.mxu0 0
        %1745 = vmatpush2.bf16.msra.mxu0 0
        %1746 = vmatprep.subr.bf16.mxu0 0
        %1747 = vmatpush2.bf16.msra.mxu0 0
        %1748 = vmatprep.subr.bf16.mxu0 0
        %1749 = vmatpush2.bf16.msra.mxu0 0
        %1750 = vmatprep.subr.bf16.mxu0 0
        %1751 = vmatpush2.bf16.msra.mxu0 0
        %1752 = vmatprep.subr.bf16.mxu0 0
        %1753 = vmatpush2.bf16.msra.mxu0 0
        %1754 = vmatprep.subr.bf16.mxu0 0
        %1755 = vmatpush2.bf16.msra.mxu0 0
        %1756 = vmatprep.subr.bf16.mxu0 0
        %1757 = vmatpush2.bf16.msra.mxu0 0
        %1758 = vmatprep.mubr.bf16.mxu0 0
        %1759 = vmatmul.mubr.bf16.gmra.mxu0 %v1721
        %v1760 = vpop.f32.mrf.mxu0
        %v1761 = vadd.f32 0.0, %v1760
        %v1762 = vpop.f32.mrf.mxu0
        %v1763 = vpop.f32.mrf.mxu0
        %v1764 = vpop.f32.mrf.mxu0
        %1765 = vdwg.mxu0
        %v1766 = vrot.slane %v1029, 4
        %v1768 = vsel %vm1224, %v1716, 0
        %v1771 = vsel %vm1276, %v1766, 0
        %1773 = vmatprep.subr.bf16.mxu0 0
        %1774 = vmatpush1.bf16.msra.mxu0 0
        %1775 = vmatprep.subr.bf16.mxu0 0
        %1776 = vmatpush1.bf16.msra.mxu0 0
        %1777 = vmatprep.subr.bf16.mxu0 0
        %1778 = vmatpush1.bf16.msra.mxu0 0
        %1779 = vmatprep.subr.bf16.mxu0 0
        %1780 = vmatpush1.bf16.msra.mxu0 0
        %1781 = vmatprep.subr.bf16.mxu0 0
        %1782 = vmatpush1.bf16.msra.mxu0 0
        %1783 = vmatprep.subr.bf16.mxu0 0
        %1784 = vmatpush1.bf16.msra.mxu0 0
        %1785 = vmatprep.subr.bf16.mxu0 0
        %1786 = vmatpush1.bf16.msra.mxu0 0
        %1787 = vmatprep.subr.bf16.mxu0 0
        %1788 = vmatpush1.bf16.msra.mxu0 %v1771
        %1789 = vmatprep.subr.bf16.mxu0 0
        %1790 = vmatpush2.bf16.msra.mxu0 0
        %1791 = vmatprep.subr.bf16.mxu0 0
        %1792 = vmatpush2.bf16.msra.mxu0 0
        %1793 = vmatprep.subr.bf16.mxu0 0
        %1794 = vmatpush2.bf16.msra.mxu0 0
        %1795 = vmatprep.subr.bf16.mxu0 0
        %1796 = vmatpush2.bf16.msra.mxu0 0
        %1797 = vmatprep.subr.bf16.mxu0 0
        %1798 = vmatpush2.bf16.msra.mxu0 0
        %1799 = vmatprep.subr.bf16.mxu0 0
        %1800 = vmatpush2.bf16.msra.mxu0 0
        %1801 = vmatprep.subr.bf16.mxu0 0
        %1802 = vmatpush2.bf16.msra.mxu0 0
        %1803 = vmatprep.subr.bf16.mxu0 0
        %1804 = vmatpush2.bf16.msra.mxu0 0
        %1805 = vmatprep.mubr.bf16.mxu0 0
        %1806 = vmatmul.mubr.bf16.gmra.mxu0 %v1768
        %v1807 = vpop.f32.mrf.mxu0
        %v1808 = vadd.f32 0.0, %v1807
        %v1809 = vpop.f32.mrf.mxu0
        %v1810 = vpop.f32.mrf.mxu0
        %v1811 = vpop.f32.mrf.mxu0
        %1812 = vdwg.mxu0
        %v1813 = vrot.slane %v1031, 4
        %v1815 = vsel %vm1224, %v1717, 0
        %v1818 = vsel %vm1276, %v1813, 0
        %1820 = vmatprep.subr.bf16.mxu0 0
        %1821 = vmatpush1.bf16.msra.mxu0 0
        %1822 = vmatprep.subr.bf16.mxu0 0
        %1823 = vmatpush1.bf16.msra.mxu0 0
        %1824 = vmatprep.subr.bf16.mxu0 0
        %1825 = vmatpush1.bf16.msra.mxu0 0
        %1826 = vmatprep.subr.bf16.mxu0 0
        %1827 = vmatpush1.bf16.msra.mxu0 0
        %1828 = vmatprep.subr.bf16.mxu0 0
        %1829 = vmatpush1.bf16.msra.mxu0 0
        %1830 = vmatprep.subr.bf16.mxu0 0
        %1831 = vmatpush1.bf16.msra.mxu0 0
        %1832 = vmatprep.subr.bf16.mxu0 0
        %1833 = vmatpush1.bf16.msra.mxu0 0
        %1834 = vmatprep.subr.bf16.mxu0 0
        %1835 = vmatpush1.bf16.msra.mxu0 %v1818
        %1836 = vmatprep.subr.bf16.mxu0 0
        %1837 = vmatpush2.bf16.msra.mxu0 0
        %1838 = vmatprep.subr.bf16.mxu0 0
        %1839 = vmatpush2.bf16.msra.mxu0 0
        %1840 = vmatprep.subr.bf16.mxu0 0
        %1841 = vmatpush2.bf16.msra.mxu0 0
        %1842 = vmatprep.subr.bf16.mxu0 0
        %1843 = vmatpush2.bf16.msra.mxu0 0
        %1844 = vmatprep.subr.bf16.mxu0 0
        %1845 = vmatpush2.bf16.msra.mxu0 0
        %1846 = vmatprep.subr.bf16.mxu0 0
        %1847 = vmatpush2.bf16.msra.mxu0 0
        %1848 = vmatprep.subr.bf16.mxu0 0
        %1849 = vmatpush2.bf16.msra.mxu0 0
        %1850 = vmatprep.subr.bf16.mxu0 0
        %1851 = vmatpush2.bf16.msra.mxu0 0
        %1852 = vmatprep.mubr.bf16.mxu0 0
        %1853 = vmatmul.mubr.bf16.gmra.mxu0 %v1815
        %v1854 = vpop.f32.mrf.mxu0
        %v1855 = vadd.f32 0.0, %v1854
        %v1856 = vpop.f32.mrf.mxu0
        %v1857 = vpop.f32.mrf.mxu0
        %v1858 = vpop.f32.mrf.mxu0
        %1859 = vdwg.mxu0
        %v1860 = vrot.slane %v1033, 4
        %v1862 = vsel %vm1224, %v1718, 0
        %v1865 = vsel %vm1276, %v1860, 0
        %1867 = vmatprep.subr.bf16.mxu0 0
        %1868 = vmatpush1.bf16.msra.mxu0 0
        %1869 = vmatprep.subr.bf16.mxu0 0
        %1870 = vmatpush1.bf16.msra.mxu0 0
        %1871 = vmatprep.subr.bf16.mxu0 0
        %1872 = vmatpush1.bf16.msra.mxu0 0
        %1873 = vmatprep.subr.bf16.mxu0 0
        %1874 = vmatpush1.bf16.msra.mxu0 0
        %1875 = vmatprep.subr.bf16.mxu0 0
        %1876 = vmatpush1.bf16.msra.mxu0 0
        %1877 = vmatprep.subr.bf16.mxu0 0
        %1878 = vmatpush1.bf16.msra.mxu0 0
        %1879 = vmatprep.subr.bf16.mxu0 0
        %1880 = vmatpush1.bf16.msra.mxu0 0
        %1881 = vmatprep.subr.bf16.mxu0 0
        %1882 = vmatpush1.bf16.msra.mxu0 %v1865
        %1883 = vmatprep.subr.bf16.mxu0 0
        %1884 = vmatpush2.bf16.msra.mxu0 0
        %1885 = vmatprep.subr.bf16.mxu0 0
        %1886 = vmatpush2.bf16.msra.mxu0 0
        %1887 = vmatprep.subr.bf16.mxu0 0
        %1888 = vmatpush2.bf16.msra.mxu0 0
        %1889 = vmatprep.subr.bf16.mxu0 0
        %1890 = vmatpush2.bf16.msra.mxu0 0
        %1891 = vmatprep.subr.bf16.mxu0 0
        %1892 = vmatpush2.bf16.msra.mxu0 0
        %1893 = vmatprep.subr.bf16.mxu0 0
        %1894 = vmatpush2.bf16.msra.mxu0 0
        %1895 = vmatprep.subr.bf16.mxu0 0
        %1896 = vmatpush2.bf16.msra.mxu0 0
        %1897 = vmatprep.subr.bf16.mxu0 0
        %1898 = vmatpush2.bf16.msra.mxu0 0
        %1899 = vmatprep.mubr.bf16.mxu0 0
        %1900 = vmatmul.mubr.bf16.gmra.mxu0 %v1862
        %v1901 = vpop.f32.mrf.mxu0
        %v1902 = vadd.f32 0.0, %v1901
        %v1903 = vpop.f32.mrf.mxu0
        %v1904 = vpop.f32.mrf.mxu0
        %v1905 = vpop.f32.mrf.mxu0
        %1906 = vdwg.mxu0
        %1908 = vrot.lane.b32.xlu0 %v1808, 32
        %v1909 = vpop.permute.xlu0 %1908
        %1912 = vrot.lane.b32.xlu0 %v1855, 64
        %v1913 = vpop.permute.xlu0 %1912
        %1916 = vrot.lane.b32.xlu0 %v1902, 96
        %v1917 = vpop.permute.xlu0 %1916
        %v1919 = vsel %vm1039, %v1761, %v1909
        %v1920 = vsel %vm1471, %v1919, %v1913
        %v1921 = vsel %vm1473, %v1920, %v1917
        %v1922 = vpack.c.bf16 %v1921, %v1474
        %v1923 = vld [vmem:[%s576] sm:$0xf]
        %v1924 = vld [vmem:[%s576 + $0x4] sm:$0xf]
        %v1925 = vld [vmem:[%s576 + $0x8] sm:$0xf]
        %v1926 = vld [vmem:[%s576 + $0xc] sm:$0xf]
        %v1927 = vld [vmem:[%s576 + $0x10] sm:$0xf]
        %v1928 = vld [vmem:[%s576 + $0x14] sm:$0xf]
        %v1929 = vld [vmem:[%s576 + $0x18] sm:$0xf]
        %v1930 = vld [vmem:[%s576 + $0x1c] sm:$0xf]
        %v1931 = vld [vmem:[%s576 + $0x20] sm:$0xf]
        %v1932 = vld [vmem:[%s576 + $0x24] sm:$0xf]
        %v1933 = vld [vmem:[%s576 + $0x28] sm:$0xf]
        %v1934 = vld [vmem:[%s576 + $0x2c] sm:$0xf]
        %v1935 = vld [vmem:[%s576 + $0x30] sm:$0xf]
        %v1936 = vld [vmem:[%s576 + $0x34] sm:$0xf]
        %v1937 = vld [vmem:[%s576 + $0x38] sm:$0xf]
        %v1938 = vld [vmem:[%s576 + $0x3c] sm:$0xf]
        %v1939 = vld [vmem:[%s672] sm:$0x1]
        %v1941 = vlaneseq
        %v1942 = vshrl.u32 %v1941, 7
        %v1943 = vsub.s32 0, %v1942
        %v1944 = vrot.slane %v1939, %v1943
        %v1962 = vunpack.c.l.b16 %v1923
        %v1963 = vunpack.c.l.b16 %v1924
        %v1964 = vunpack.c.l.b16 %v1925
        %v1965 = vunpack.c.l.b16 %v1926
        %v1966 = vunpack.c.l.b16 %v1927
        %v1967 = vunpack.c.l.b16 %v1928
        %v1968 = vunpack.c.l.b16 %v1929
        %v1969 = vunpack.c.l.b16 %v1930
        %v1970 = vunpack.c.l.b16 %v1931
        %v1971 = vunpack.c.l.b16 %v1932
        %v1972 = vunpack.c.l.b16 %v1933
        %v1973 = vunpack.c.l.b16 %v1934
        %v1974 = vunpack.c.l.b16 %v1935
        %v1975 = vunpack.c.l.b16 %v1936
        %v1976 = vunpack.c.l.b16 %v1937
        %v1977 = vunpack.c.l.b16 %v1938
        %v1978 = vpack.c.b16 %v1963, %v1962
        %v1979 = vpack.c.b16 %v1965, %v1964
        %v1980 = vpack.c.b16 %v1967, %v1966
        %v1981 = vpack.c.b16 %v1969, %v1968
        %v1982 = vpack.c.b16 %v1971, %v1970
        %v1983 = vpack.c.b16 %v1973, %v1972
        %v1984 = vpack.c.b16 %v1975, %v1974
        %v1985 = vpack.c.b16 %v1977, %v1976
        %1994 = vmatprep.subr.bf16.mxu0 0
        %1995 = vmatpush1.bf16.msra.mxu0 %v1985
        %1996 = vmatprep.subr.bf16.mxu0 0
        %1997 = vmatpush1.bf16.msra.mxu0 %v1984
        %1998 = vmatprep.subr.bf16.mxu0 0
        %1999 = vmatpush1.bf16.msra.mxu0 %v1983
        %2000 = vmatprep.subr.bf16.mxu0 0
        %2001 = vmatpush1.bf16.msra.mxu0 %v1982
        %2002 = vmatprep.subr.bf16.mxu0 0
        %2003 = vmatpush1.bf16.msra.mxu0 %v1981
        %2004 = vmatprep.subr.bf16.mxu0 0
        %2005 = vmatpush1.bf16.msra.mxu0 %v1980
        %2006 = vmatprep.subr.bf16.mxu0 0
        %2007 = vmatpush1.bf16.msra.mxu0 %v1979
        %2008 = vmatprep.subr.bf16.mxu0 0
        %2009 = vmatpush1.bf16.msra.mxu0 %v1978
        %2010 = vmatprep.subr.bf16.mxu0 0
        %2011 = vmatpush2.bf16.msra.mxu0 0
        %2012 = vmatprep.subr.bf16.mxu0 0
        %2013 = vmatpush2.bf16.msra.mxu0 0
        %2014 = vmatprep.subr.bf16.mxu0 0
        %2015 = vmatpush2.bf16.msra.mxu0 0
        %2016 = vmatprep.subr.bf16.mxu0 0
        %2017 = vmatpush2.bf16.msra.mxu0 0
        %2018 = vmatprep.subr.bf16.mxu0 0
        %2019 = vmatpush2.bf16.msra.mxu0 0
        %2020 = vmatprep.subr.bf16.mxu0 0
        %2021 = vmatpush2.bf16.msra.mxu0 0
        %2022 = vmatprep.subr.bf16.mxu0 0
        %2023 = vmatpush2.bf16.msra.mxu0 0
        %2024 = vmatprep.subr.bf16.mxu0 0
        %2025 = vmatpush2.bf16.msra.mxu0 0
        %2026 = vmatprep.mubr.bf16.mxu0 0
        %2027 = vmatmul.mubr.bf16.gmra.mxu0 %v1922
        %v2028 = vpop.f32.mrf.mxu0
        %v2029 = vadd.f32 %v1944, %v2028
        %v2030 = vpop.f32.mrf.mxu0
        %v2031 = vpop.f32.mrf.mxu0
        %v2032 = vadd.f32 %v1944, %v2031
        %v2033 = vpop.f32.mrf.mxu0
        %2034 = vdwg.mxu0
        %v2035 = vadd.f32 %v2029, %v746
        %v2036 = vadd.f32 %v2032, %v747
        %v2037 = vpack.c.bf16 %v2036, %v2035
        %v2038 = vld [vmem:[%s585] sm:$0xff]
        %v2039 = vld [vmem:[%s585 + $0x8] sm:$0xff]
        %v2040 = vld [vmem:[%s585 + $0x10] sm:$0xff]
        %v2041 = vld [vmem:[%s585 + $0x18] sm:$0xff]
        %v2042 = vld [vmem:[%s585 + $0x20] sm:$0xff]
        %v2043 = vld [vmem:[%s585 + $0x28] sm:$0xff]
        %v2044 = vld [vmem:[%s585 + $0x30] sm:$0xff]
        %v2045 = vld [vmem:[%s585 + $0x38] sm:$0xff]
        %v2046 = vld [vmem:[%s585 + $0x40] sm:$0xff]
        %v2047 = vld [vmem:[%s585 + $0x48] sm:$0xff]
        %v2048 = vld [vmem:[%s585 + $0x50] sm:$0xff]
        %v2049 = vld [vmem:[%s585 + $0x58] sm:$0xff]
        %v2050 = vld [vmem:[%s585 + $0x60] sm:$0xff]
        %v2051 = vld [vmem:[%s585 + $0x68] sm:$0xff]
        %v2052 = vld [vmem:[%s585 + $0x70] sm:$0xff]
        %v2053 = vld [vmem:[%s585 + $0x78] sm:$0xff]
        %v2054 = vld [vmem:[%s676] sm:$0x3]
        %v2056 = vlaneseq
        %v2057 = vshrl.u32 %v2056, 7
        %v2058 = vsub.s32 0, %v2057
        %v2059 = vrot.slane %v2054, %v2058
        %v2060 = vlaneseq
        %v2061 = vshrl.u32 %v2060, 7
        %v2062 = vsub.s32 1, %v2061
        %v2063 = vrot.slane %v2054, %v2062
        %v2082 = vunpack.c.l.b16 %v2038
        %v2083 = vunpack.c.h.b16 %v2038
        %v2084 = vunpack.c.l.b16 %v2039
        %v2085 = vunpack.c.h.b16 %v2039
        %v2086 = vunpack.c.l.b16 %v2040
        %v2087 = vunpack.c.h.b16 %v2040
        %v2088 = vunpack.c.l.b16 %v2041
        %v2089 = vunpack.c.h.b16 %v2041
        %v2090 = vunpack.c.l.b16 %v2042
        %v2091 = vunpack.c.h.b16 %v2042
        %v2092 = vunpack.c.l.b16 %v2043
        %v2093 = vunpack.c.h.b16 %v2043
        %v2094 = vunpack.c.l.b16 %v2044
        %v2095 = vunpack.c.h.b16 %v2044
        %v2096 = vunpack.c.l.b16 %v2045
        %v2097 = vunpack.c.h.b16 %v2045
        %v2098 = vunpack.c.l.b16 %v2046
        %v2099 = vunpack.c.h.b16 %v2046
        %v2100 = vunpack.c.l.b16 %v2047
        %v2101 = vunpack.c.h.b16 %v2047
        %v2102 = vunpack.c.l.b16 %v2048
        %v2103 = vunpack.c.h.b16 %v2048
        %v2104 = vunpack.c.l.b16 %v2049
        %v2105 = vunpack.c.h.b16 %v2049
        %v2106 = vunpack.c.l.b16 %v2050
        %v2107 = vunpack.c.h.b16 %v2050
        %v2108 = vunpack.c.l.b16 %v2051
        %v2109 = vunpack.c.h.b16 %v2051
        %v2110 = vunpack.c.l.b16 %v2052
        %v2111 = vunpack.c.h.b16 %v2052
        %v2112 = vunpack.c.l.b16 %v2053
        %v2113 = vunpack.c.h.b16 %v2053
        %v2114 = vpack.c.b16 %v2084, %v2082
        %v2115 = vpack.c.b16 %v2085, %v2083
        %v2116 = vpack.c.b16 %v2088, %v2086
        %v2117 = vpack.c.b16 %v2089, %v2087
        %v2118 = vpack.c.b16 %v2092, %v2090
        %v2119 = vpack.c.b16 %v2093, %v2091
        %v2120 = vpack.c.b16 %v2096, %v2094
        %v2121 = vpack.c.b16 %v2097, %v2095
        %v2122 = vpack.c.b16 %v2100, %v2098
        %v2123 = vpack.c.b16 %v2101, %v2099
        %v2124 = vpack.c.b16 %v2104, %v2102
        %v2125 = vpack.c.b16 %v2105, %v2103
        %v2126 = vpack.c.b16 %v2108, %v2106
        %v2127 = vpack.c.b16 %v2109, %v2107
        %v2128 = vpack.c.b16 %v2112, %v2110
        %v2129 = vpack.c.b16 %v2113, %v2111
        %2146 = vmatprep.subr.bf16.mxu0 %v2129
        %2147 = vmatpush1.bf16.msra.mxu0 %v2128
        %2148 = vmatprep.subr.bf16.mxu0 %v2127
        %2149 = vmatpush1.bf16.msra.mxu0 %v2126
        %2150 = vmatprep.subr.bf16.mxu0 %v2125
        %2151 = vmatpush1.bf16.msra.mxu0 %v2124
        %2152 = vmatprep.subr.bf16.mxu0 %v2123
        %2153 = vmatpush1.bf16.msra.mxu0 %v2122
        %2154 = vmatprep.subr.bf16.mxu0 %v2121
        %2155 = vmatpush1.bf16.msra.mxu0 %v2120
        %2156 = vmatprep.subr.bf16.mxu0 %v2119
        %2157 = vmatpush1.bf16.msra.mxu0 %v2118
        %2158 = vmatprep.subr.bf16.mxu0 %v2117
        %2159 = vmatpush1.bf16.msra.mxu0 %v2116
        %2160 = vmatprep.subr.bf16.mxu0 %v2115
        %2161 = vmatpush1.bf16.msra.mxu0 %v2114
        %2162 = vmatprep.subr.bf16.mxu0 0
        %2163 = vmatpush2.bf16.msra.mxu0 0
        %2164 = vmatprep.subr.bf16.mxu0 0
        %2165 = vmatpush2.bf16.msra.mxu0 0
        %2166 = vmatprep.subr.bf16.mxu0 0
        %2167 = vmatpush2.bf16.msra.mxu0 0
        %2168 = vmatprep.subr.bf16.mxu0 0
        %2169 = vmatpush2.bf16.msra.mxu0 0
        %2170 = vmatprep.subr.bf16.mxu0 0
        %2171 = vmatpush2.bf16.msra.mxu0 0
        %2172 = vmatprep.subr.bf16.mxu0 0
        %2173 = vmatpush2.bf16.msra.mxu0 0
        %2174 = vmatprep.subr.bf16.mxu0 0
        %2175 = vmatpush2.bf16.msra.mxu0 0
        %2176 = vmatprep.subr.bf16.mxu0 0
        %2177 = vmatpush2.bf16.msra.mxu0 0
        %2178 = vmatprep.mubr.bf16.mxu0 0
        %2179 = vmatmul.mubr.bf16.gmra.mxu0 %v2037
        %v2180 = vpop.f32.mrf.mxu0
        %v2181 = vadd.f32 %v2059, %v2180
        %v2182 = vpop.f32.mrf.mxu0
        %v2183 = vadd.f32 %v2063, %v2182
        %v2184 = vpop.f32.mrf.mxu0
        %v2185 = vadd.f32 %v2059, %v2184
        %v2186 = vpop.f32.mrf.mxu0
        %v2187 = vadd.f32 %v2063, %v2186
        %2188 = vdwg.mxu0
        %v2189 = vmax.f32 %v2181, 0.0
        %v2190 = vmax.f32 %v2183, 0.0
        %v2191 = vmax.f32 %v2185, 0.0
        %v2192 = vmax.f32 %v2187, 0.0
        %v2193 = vpack.c.bf16 %v2191, %v2189
        %v2194 = vpack.c.bf16 %v2192, %v2190
        %v2195 = vld [vmem:[%s594] sm:$0xf]
        %v2196 = vld [vmem:[%s594 + $0x4] sm:$0xf]
        %v2197 = vld [vmem:[%s594 + $0x8] sm:$0xf]
        %v2198 = vld [vmem:[%s594 + $0xc] sm:$0xf]
        %v2199 = vld [vmem:[%s594 + $0x10] sm:$0xf]
        %v2200 = vld [vmem:[%s594 + $0x14] sm:$0xf]
        %v2201 = vld [vmem:[%s594 + $0x18] sm:$0xf]
        %v2202 = vld [vmem:[%s594 + $0x1c] sm:$0xf]
        %v2203 = vld [vmem:[%s594 + $0x20] sm:$0xf]
        %v2204 = vld [vmem:[%s594 + $0x24] sm:$0xf]
        %v2205 = vld [vmem:[%s594 + $0x28] sm:$0xf]
        %v2206 = vld [vmem:[%s594 + $0x2c] sm:$0xf]
        %v2207 = vld [vmem:[%s594 + $0x30] sm:$0xf]
        %v2208 = vld [vmem:[%s594 + $0x34] sm:$0xf]
        %v2209 = vld [vmem:[%s594 + $0x38] sm:$0xf]
        %v2210 = vld [vmem:[%s594 + $0x3c] sm:$0xf]
        %v2211 = vld [vmem:[%s594 + $0x40] sm:$0xf]
        %v2212 = vld [vmem:[%s594 + $0x44] sm:$0xf]
        %v2213 = vld [vmem:[%s594 + $0x48] sm:$0xf]
        %v2214 = vld [vmem:[%s594 + $0x4c] sm:$0xf]
        %v2215 = vld [vmem:[%s594 + $0x50] sm:$0xf]
        %v2216 = vld [vmem:[%s594 + $0x54] sm:$0xf]
        %v2217 = vld [vmem:[%s594 + $0x58] sm:$0xf]
        %v2218 = vld [vmem:[%s594 + $0x5c] sm:$0xf]
        %v2219 = vld [vmem:[%s594 + $0x60] sm:$0xf]
        %v2220 = vld [vmem:[%s594 + $0x64] sm:$0xf]
        %v2221 = vld [vmem:[%s594 + $0x68] sm:$0xf]
        %v2222 = vld [vmem:[%s594 + $0x6c] sm:$0xf]
        %v2223 = vld [vmem:[%s594 + $0x70] sm:$0xf]
        %v2224 = vld [vmem:[%s594 + $0x74] sm:$0xf]
        %v2225 = vld [vmem:[%s594 + $0x78] sm:$0xf]
        %v2226 = vld [vmem:[%s594 + $0x7c] sm:$0xf]
        %v2227 = vld [vmem:[%s679] sm:$0x1]
        %v2229 = vlaneseq
        %v2230 = vshrl.u32 %v2229, 7
        %v2231 = vsub.s32 0, %v2230
        %v2232 = vrot.slane %v2227, %v2231
        %v2266 = vunpack.c.l.b16 %v2195
        %v2267 = vunpack.c.l.b16 %v2196
        %v2268 = vunpack.c.l.b16 %v2197
        %v2269 = vunpack.c.l.b16 %v2198
        %v2270 = vunpack.c.l.b16 %v2199
        %v2271 = vunpack.c.l.b16 %v2200
        %v2272 = vunpack.c.l.b16 %v2201
        %v2273 = vunpack.c.l.b16 %v2202
        %v2274 = vunpack.c.l.b16 %v2203
        %v2275 = vunpack.c.l.b16 %v2204
        %v2276 = vunpack.c.l.b16 %v2205
        %v2277 = vunpack.c.l.b16 %v2206
        %v2278 = vunpack.c.l.b16 %v2207
        %v2279 = vunpack.c.l.b16 %v2208
        %v2280 = vunpack.c.l.b16 %v2209
        %v2281 = vunpack.c.l.b16 %v2210
        %v2282 = vunpack.c.l.b16 %v2211
        %v2283 = vunpack.c.l.b16 %v2212
        %v2284 = vunpack.c.l.b16 %v2213
        %v2285 = vunpack.c.l.b16 %v2214
        %v2286 = vunpack.c.l.b16 %v2215
        %v2287 = vunpack.c.l.b16 %v2216
        %v2288 = vunpack.c.l.b16 %v2217
        %v2289 = vunpack.c.l.b16 %v2218
        %v2290 = vunpack.c.l.b16 %v2219
        %v2291 = vunpack.c.l.b16 %v2220
        %v2292 = vunpack.c.l.b16 %v2221
        %v2293 = vunpack.c.l.b16 %v2222
        %v2294 = vunpack.c.l.b16 %v2223
        %v2295 = vunpack.c.l.b16 %v2224
        %v2296 = vunpack.c.l.b16 %v2225
        %v2297 = vunpack.c.l.b16 %v2226
        %v2298 = vpack.c.b16 %v2267, %v2266
        %v2299 = vpack.c.b16 %v2269, %v2268
        %v2300 = vpack.c.b16 %v2271, %v2270
        %v2301 = vpack.c.b16 %v2273, %v2272
        %v2302 = vpack.c.b16 %v2275, %v2274
        %v2303 = vpack.c.b16 %v2277, %v2276
        %v2304 = vpack.c.b16 %v2279, %v2278
        %v2305 = vpack.c.b16 %v2281, %v2280
        %v2306 = vpack.c.b16 %v2283, %v2282
        %v2307 = vpack.c.b16 %v2285, %v2284
        %v2308 = vpack.c.b16 %v2287, %v2286
        %v2309 = vpack.c.b16 %v2289, %v2288
        %v2310 = vpack.c.b16 %v2291, %v2290
        %v2311 = vpack.c.b16 %v2293, %v2292
        %v2312 = vpack.c.b16 %v2295, %v2294
        %v2313 = vpack.c.b16 %v2297, %v2296
        %2330 = vmatprep.subr.bf16.mxu0 0
        %2331 = vmatpush1.bf16.msra.mxu0 %v2305
        %2332 = vmatprep.subr.bf16.mxu0 0
        %2333 = vmatpush1.bf16.msra.mxu0 %v2304
        %2334 = vmatprep.subr.bf16.mxu0 0
        %2335 = vmatpush1.bf16.msra.mxu0 %v2303
        %2336 = vmatprep.subr.bf16.mxu0 0
        %2337 = vmatpush1.bf16.msra.mxu0 %v2302
        %2338 = vmatprep.subr.bf16.mxu0 0
        %2339 = vmatpush1.bf16.msra.mxu0 %v2301
        %2340 = vmatprep.subr.bf16.mxu0 0
        %2341 = vmatpush1.bf16.msra.mxu0 %v2300
        %2342 = vmatprep.subr.bf16.mxu0 0
        %2343 = vmatpush1.bf16.msra.mxu0 %v2299
        %2344 = vmatprep.subr.bf16.mxu0 0
        %2345 = vmatpush1.bf16.msra.mxu0 %v2298
        %2346 = vmatprep.subr.bf16.mxu0 0
        %2347 = vmatpush2.bf16.msra.mxu0 %v2313
        %2348 = vmatprep.subr.bf16.mxu0 0
        %2349 = vmatpush2.bf16.msra.mxu0 %v2312
        %2350 = vmatprep.subr.bf16.mxu0 0
        %2351 = vmatpush2.bf16.msra.mxu0 %v2311
        %2352 = vmatprep.subr.bf16.mxu0 0
        %2353 = vmatpush2.bf16.msra.mxu0 %v2310
        %2354 = vmatprep.subr.bf16.mxu0 0
        %2355 = vmatpush2.bf16.msra.mxu0 %v2309
        %2356 = vmatprep.subr.bf16.mxu0 0
        %2357 = vmatpush2.bf16.msra.mxu0 %v2308
        %2358 = vmatprep.subr.bf16.mxu0 0
        %2359 = vmatpush2.bf16.msra.mxu0 %v2307
        %2360 = vmatprep.subr.bf16.mxu0 0
        %2361 = vmatpush2.bf16.msra.mxu0 %v2306
        %2362 = vmatprep.mubr.bf16.mxu0 %v2194
        %2363 = vmatmul.mubr.bf16.gmra.mxu0 %v2193
        %v2364 = vpop.f32.mrf.mxu0
        %v2365 = vadd.f32 %v2232, %v2364
        %v2366 = vpop.f32.mrf.mxu0
        %v2367 = vpop.f32.mrf.mxu0
        %v2368 = vadd.f32 %v2232, %v2367
        %v2369 = vpop.f32.mrf.mxu0
        %2370 = vdwg.mxu0
        %v2371 = vadd.f32 %v2365, %v2035
        %v2372 = vadd.f32 %v2368, %v2036
        %2373 = vst [vmem:[#allocation17] sm:$0xff] %v2371
        %2374 = vst [vmem:[#allocation17 + $0x8] sm:$0xff] %v2372
        // Predicated region
        $region97: #{tpu_custom_call.1} parent=63 // pred_check
          %p2375 = pneg %p354
        $region98: #{tpu_custom_call.1} parent=63 // pred_check_branch
          %2377 = sbr.rel (%p2375) target = $region100
        $region99: #{tpu_custom_call.1} parent=63 // pred_region
          %s2378 = smul.u32 2, %s42
          %s2380 = ssub.s32 256, 256
          %2381 = vsyncadd [#allocation7], %s2380
          %s2382 = smul.addr %s2378, 128
          %s2383 = scalar_lea.hbm %s12, %s2382
          %s2384 = sshll.u32 [#allocation17], 4
          %s2385 = int_to_ptr.vmem [resolvable:$true] %s2384
          %2390 = dma.vmem_to_hbm [thread:$0]  %s2385, 256, %s2383, [#allocation7], 128, 128, 8
        $region100: #{tpu_custom_call.1} parent=63 // pred_fallthru
          _
        // Predicated region
        $region101: #{tpu_custom_call.1} parent=63 // pred_check
          %p2391 = pneg %p354
        $region102: #{tpu_custom_call.1} parent=63 // pred_check_branch
          %2393 = sbr.rel (%p2391) target = $region104
        $region103: #{tpu_custom_call.1} parent=63 // pred_region
          %2394 = dma.done [#allocation7], 256
        $region104: #{tpu_custom_call.1} parent=63 // pred_fallthru
          _
      $region64: #{tpu_custom_call.1} parent=5 // pred_fallthru
        _
      %p2395 = scmp.le.s32.totalorder 2, %s33
      // Predicated region
      $region105: #{tpu_custom_call.1} parent=5 // pred_check
        %p2396 = pneg %p2395
      $region106: #{tpu_custom_call.1} parent=5 // pred_check_branch
        %2398 = sbr.rel (%p2396) target = $region108
      $region107: #{tpu_custom_call.1} parent=5 // pred_region
        %s2399 = ssub.s32 %s33, 2
      $region108: #{tpu_custom_call.1} parent=5 // pred_fallthru
        _
    $region6: #{tpu_custom_call.1} parent=1 // loop_footer
      %s37 = sadd.s32 1, %s33
    $region7: #{tpu_custom_call.1} parent=1 // loop_footer_branch
      %32 = sbr.rel target = $region3
    $region8: #{tpu_custom_call.1} parent=1 // loop_exit
      _
    %2400 = vsyncpa [#allocation6], 1
    %s2401 = scalar_lea.sflag [#allocation6], 1
    %2402 = vsyncpa %s2401, 1
    %2403 = vsyncpa [#allocation9], 1
    %s2404 = scalar_lea.sflag [#allocation9], 1
    %2405 = vsyncpa %s2404, 1
    %2406 = vsyncpa [#allocation12], 1
    %s2407 = scalar_lea.sflag [#allocation12], 1
    %2408 = vsyncpa %s2407, 1
    %2409 = vsyncpa [#allocation15], 1
    %s2410 = scalar_lea.sflag [#allocation15], 1
    %2411 = vsyncpa %s2410, 1
    %2412 = vsyncpa [#allocation7], 1
    %s2413 = scalar_lea.sflag [#allocation7], 1
    %2414 = vsyncpa %s2413, 1

</llo_original>
